<compile_context>
chip_gen: v6e
topology: v6e:2x2x1
jax: 0.10.0
libtpu: 0.0.40
codegen_flags: <defaults>
</compile_context>

<pallas_src>
import numpy as np
import jax
import jax.numpy as jnp
from jax import lax
from jax.experimental import pallas as pl
from jax.experimental.pallas import tpu as pltpu


def elstm_kernel(x_ref, wih0_ref, whh0_ref, b0_ref, wih1_ref, whh1_ref, b1_ref,
                 h_ref, c_ref, xproj_ref, h0seq_ref):
    seq_len = x_ref.shape[0]
    H = whh0_ref.shape[0]
    unroll = bool(seq_len <= 64)   # fully unroll short sequences (LLO visibility)

    def gates_to_hc(gates, c_prev):
        # Two full 128-lane EUP passes; i/f/g/o picked with static lane slices.
        sig = jax.nn.sigmoid(gates)
        th = jnp.tanh(gates)
        i = sig[:, 0:H]
        f = sig[:, H:2 * H]
        g = th[:, 2 * H:3 * H]
        o = sig[:, 3 * H:4 * H]
        c_new = f * c_prev + i * g
        h_new = o * jnp.tanh(c_new)
        return h_new, c_new

    z = jnp.zeros((1, H), jnp.float32)

    # ---- Pass 1: layer 0 ---------------------------------------------------
    # Hoisted input projection for the whole sequence: one (seq, I) @ (I, 4H)
    # MXU matmul with the fused bias added once.
    xproj_ref[...] = (
        jnp.dot(x_ref[...], wih0_ref[...], preferred_element_type=jnp.float32)
        + b0_ref[...])

    whh0 = whh0_ref[...]          # (H, 4H), loop-invariant, held in vregs

    def step0(t, carry):
        h0, c0 = carry
        g = xproj_ref[pl.ds(t, 1), :] + jnp.dot(
            h0, whh0, preferred_element_type=jnp.float32)
        h0, c0 = gates_to_hc(g, c0)
        h0seq_ref[pl.ds(t, 1), :] = h0      # store is off the serial chain
        return (h0, c0)

    h0, c0 = lax.fori_loop(0, seq_len, step0, (z, z), unroll=unroll)

    # ---- Bulk layer-1 input projection --------------------------------------
    # (seq, H) @ (H, 4H) as one MXU matmul; reuses the xproj scratch (pass 1 is
    # done reading it by program order).
    xproj_ref[...] = (
        jnp.dot(h0seq_ref[...], wih1_ref[...], preferred_element_type=jnp.float32)
        + b1_ref[...])

    # ---- Pass 2: layer 1 ----------------------------------------------------
    whh1 = whh1_ref[...]          # (H, 4H)

    def step1(t, carry):
        h1, c1 = carry
        g = xproj_ref[pl.ds(t, 1), :] + jnp.dot(
            h1, whh1, preferred_element_type=jnp.float32)
        return gates_to_hc(g, c1)

    h1, c1 = lax.fori_loop(0, seq_len, step1, (z, z), unroll=unroll)

    # Single write of the final state.
    h_ref[0:1, :] = h0
    h_ref[1:2, :] = h1
    c_ref[0:1, :] = c0
    c_ref[1:2, :] = c1


def elstm_forward(frame_features, params):
    """frame_features: [seq_len, 1, input_size] -> (h_last, c_last) each [2, 1, H]."""
    seq_len, batch, input_size = frame_features.shape
    assert batch == 1, "eLSTM forward assumes batch=1 (as in the reference module)"
    H = params["weight_hh_l0"].shape[1]

    x2d = frame_features[:, 0, :].astype(jnp.float32)               # (seq, I)
    # Pre-transpose weights; fuse the two bias vectors per layer (PyTorch adds both).
    wih0_t = params["weight_ih_l0"].T                               # (I, 4H)
    whh0_t = params["weight_hh_l0"].T                               # (H, 4H)
    b0 = (params["bias_ih_l0"] + params["bias_hh_l0"]).reshape(1, 4 * H)
    wih1_t = params["weight_ih_l1"].T                               # (H, 4H)
    whh1_t = params["weight_hh_l1"].T                               # (H, 4H)
    b1 = (params["bias_ih_l1"] + params["bias_hh_l1"]).reshape(1, 4 * H)

    vmem = pl.BlockSpec(memory_space=pltpu.MemorySpace.VMEM)
    h_last, c_last = pl.pallas_call(
        elstm_kernel,
        out_shape=(jax.ShapeDtypeStruct((2, H), jnp.float32),
                   jax.ShapeDtypeStruct((2, H), jnp.float32)),
        in_specs=[vmem] * 7,
        out_specs=(vmem, vmem),
        scratch_shapes=[pltpu.VMEM((seq_len, 4 * H), jnp.float32),   # xproj (reused)
                        pltpu.VMEM((seq_len, H), jnp.float32)],      # h0 sequence
    )(x2d, wih0_t, whh0_t, b0, wih1_t, whh1_t, b1)

    return h_last.reshape(2, 1, H), c_last.reshape(2, 1, H)


def elstm_reference(frame_features, params):
    """Pure-JAX reference (PyTorch nn.LSTM semantics, 2 layers, batch=1)."""
    seq_len, _, _ = frame_features.shape
    H = params["weight_hh_l0"].shape[1]
    x = frame_features[:, 0, :]                                     # (seq, I)

    def cell(x_t, h, c, wih, whh, bih, bhh):
        g = x_t @ wih.T + bih + h @ whh.T + bhh
        i = jax.nn.sigmoid(g[0:H])
        f = jax.nn.sigmoid(g[H:2 * H])
        gg = jnp.tanh(g[2 * H:3 * H])
        o = jax.nn.sigmoid(g[3 * H:4 * H])
        c_new = f * c + i * gg
        return o * jnp.tanh(c_new), c_new

    def step(carry, x_t):
        (h0, c0, h1, c1) = carry
        h0, c0 = cell(x_t, h0, c0, params["weight_ih_l0"], params["weight_hh_l0"],
                      params["bias_ih_l0"], params["bias_hh_l0"])
        h1, c1 = cell(h0, h1, c1, params["weight_ih_l1"], params["weight_hh_l1"],
                      params["bias_ih_l1"], params["bias_hh_l1"])
        return (h0, c0, h1, c1), None

    z = jnp.zeros((H,), jnp.float32)
    (h0, c0, h1, c1), _ = lax.scan(step, (z, z, z, z), x)
    h_last = jnp.stack([h0, h1]).reshape(2, 1, H)
    c_last = jnp.stack([c0, c1]).reshape(2, 1, H)
    return h_last, c_last


def init_params(key, input_size, hidden_size):
    """Deterministic init matching PyTorch nn.LSTM default U(-1/sqrt(H), 1/sqrt(H))."""
    H = hidden_size
    bound = 1.0 / np.sqrt(H)
    names_shapes = [
        ("weight_ih_l0", (4 * H, input_size)),
        ("weight_hh_l0", (4 * H, H)),
        ("bias_ih_l0", (4 * H,)),
        ("bias_hh_l0", (4 * H,)),
        ("weight_ih_l1", (4 * H, H)),
        ("weight_hh_l1", (4 * H, H)),
        ("bias_ih_l1", (4 * H,)),
        ("bias_hh_l1", (4 * H,)),
        # present in __init__ but unused in forward():
        ("linear_mu_w", (H, H)),
        ("linear_mu_b", (H,)),
        ("linear_var_w", (H, H)),
        ("linear_var_b", (H,)),
    ]
    keys = jax.random.split(key, len(names_shapes))
    return {n: jax.random.uniform(k, s, jnp.float32, -bound, bound)
            for (n, s), k in zip(names_shapes, keys)}


if __name__ == "__main__":
    seq_len, hidden_size = 8, 32
    input_size = hidden_size            # forward docstring: features are [seq, 1, hidden]

    key = jax.random.PRNGKey(0)
    k_par, k_x = jax.random.split(key)
    params = init_params(k_par, input_size, hidden_size)
    frame_features = jax.random.normal(k_x, (seq_len, 1, input_size), jnp.float32)

    h_last, c_last = elstm_forward(frame_features, params)
    h_last = jax.block_until_ready(h_last)
    c_last = jax.block_until_ready(c_last)

    h_ref, c_ref = elstm_reference(frame_features, params)
    np.testing.assert_allclose(np.asarray(h_last), np.asarray(h_ref), rtol=1e-5, atol=1e-5)
    np.testing.assert_allclose(np.asarray(c_last), np.asarray(c_ref), rtol=1e-5, atol=1e-5)
    assert h_last.shape == (2, 1, hidden_size) and c_last.shape == (2, 1, hidden_size)

    # TODO(synk): linear_mu / linear_var are defined in eLSTM.__init__ but never
    # applied in forward(); they are intentionally not part of the kernel.
    print("KERNEL_OK")
</pallas_src>

<mosaic_0001>
module attributes {stable_mosaic.version = 11 : i64} {
  func.func @elstm_kernel(%arg0: memref<8x32xf32, #tpu.memory_space<vmem>>, %arg1: memref<32x128xf32, #tpu.memory_space<vmem>>, %arg2: memref<32x128xf32, #tpu.memory_space<vmem>>, %arg3: memref<1x128xf32, #tpu.memory_space<vmem>>, %arg4: memref<32x128xf32, #tpu.memory_space<vmem>>, %arg5: memref<32x128xf32, #tpu.memory_space<vmem>>, %arg6: memref<1x128xf32, #tpu.memory_space<vmem>>, %arg7: memref<2x32xf32, #tpu.memory_space<vmem>>, %arg8: memref<2x32xf32, #tpu.memory_space<vmem>>, %arg9: memref<8x128xf32, #tpu.memory_space<vmem>>, %arg10: memref<8x32xf32, #tpu.memory_space<vmem>>) attributes {dimension_semantics = [], scalar_prefetch = 0 : i64, scratch_operands = 2 : i64, tpu.core_type = #tpu.core_type<tc>} {
    %cst = arith.constant 0.000000e+00 : f32
    %0 = vector.broadcast %cst : f32 to vector<1x32xf32>
    %c0 = arith.constant 0 : index
    %c0_0 = arith.constant 0 : index
    %1 = vector.load %arg0[%c0, %c0_0] : memref<8x32xf32, #tpu.memory_space<vmem>>, vector<8x32xf32>
    %c0_1 = arith.constant 0 : index
    %c0_2 = arith.constant 0 : index
    %2 = vector.load %arg1[%c0_1, %c0_2] : memref<32x128xf32, #tpu.memory_space<vmem>>, vector<32x128xf32>
    %cst_3 = arith.constant dense<0.000000e+00> : vector<8x128xf32>
    %3 = tpu.matmul %1, %2, %cst_3 {dimension_numbers = #tpu.dot_dimension_numbers<[1], [0], [0], [1], [0, 0, 1, 1], [], []>} : vector<8x32xf32>, vector<32x128xf32>, vector<8x128xf32> -> vector<8x128xf32>
    %c0_4 = arith.constant 0 : index
    %c0_5 = arith.constant 0 : index
    %4 = vector.load %arg3[%c0_4, %c0_5] : memref<1x128xf32, #tpu.memory_space<vmem>>, vector<1x128xf32>
    %5 = vector.broadcast %4 : vector<1x128xf32> to vector<8x128xf32>
    %6 = arith.addf %3, %5 : vector<8x128xf32>
    %c0_6 = arith.constant 0 : index
    %c0_7 = arith.constant 0 : index
    %7 = vector.load %arg9[%c0_6, %c0_7] : memref<8x128xf32, #tpu.memory_space<vmem>>, vector<8x128xf32>
    tpu.vector_store %arg9[%c0_6, %c0_7], %6 {strides = array<i32>} : memref<8x128xf32, #tpu.memory_space<vmem>>, vector<8x128xf32>,
    %c0_8 = arith.constant 0 : index
    %c0_9 = arith.constant 0 : index
    %8 = vector.load %arg2[%c0_8, %c0_9] : memref<32x128xf32, #tpu.memory_space<vmem>>, vector<32x128xf32>
    %c0_i32 = arith.constant 0 : i32
    %9 = arith.index_cast %c0_i32 : i32 to index
    %c0_10 = arith.constant 0 : index
    %10 = vector.load %arg9[%9, %c0_10] : memref<8x128xf32, #tpu.memory_space<vmem>>, vector<1x128xf32>
    %cst_11 = arith.constant dense<0.000000e+00> : vector<1x128xf32>
    %11 = tpu.matmul %0, %8, %cst_11 {dimension_numbers = #tpu.dot_dimension_numbers<[1], [0], [0], [1], [0, 0, 1, 1], [], []>} : vector<1x32xf32>, vector<32x128xf32>, vector<1x128xf32> -> vector<1x128xf32>
    %12 = arith.addf %10, %11 : vector<1x128xf32>
    %13 = arith.negf %12 : vector<1x128xf32>
    %14 = math.exp %13 : vector<1x128xf32>
    %cst_12 = arith.constant 1.000000e+00 : f32
    %15 = vector.broadcast %cst_12 : f32 to vector<1x128xf32>
    %16 = arith.addf %15, %14 : vector<1x128xf32>
    %17 = arith.divf %15, %16 : vector<1x128xf32>
    %18 = math.tanh %12 : vector<1x128xf32>
    %19 = vector.extract_strided_slice %17 {offsets = [0, 0], sizes = [1, 32], strides = [1, 1]} : vector<1x128xf32> to vector<1x32xf32>
    %20 = vector.extract_strided_slice %17 {offsets = [0, 32], sizes = [1, 32], strides = [1, 1]} : vector<1x128xf32> to vector<1x32xf32>
    %21 = vector.extract_strided_slice %18 {offsets = [0, 64], sizes = [1, 32], strides = [1, 1]} : vector<1x128xf32> to vector<1x32xf32>
    %22 = vector.extract_strided_slice %17 {offsets = [0, 96], sizes = [1, 32], strides = [1, 1]} : vector<1x128xf32> to vector<1x32xf32>
    %23 = arith.mulf %20, %0 : vector<1x32xf32>
    %24 = arith.mulf %19, %21 : vector<1x32xf32>
    %25 = arith.addf %23, %24 : vector<1x32xf32>
    %26 = math.tanh %25 : vector<1x32xf32>
    %27 = arith.mulf %22, %26 : vector<1x32xf32>
    %28 = arith.index_cast %c0_i32 : i32 to index
    %c0_13 = arith.constant 0 : index
    %29 = vector.load %arg10[%28, %c0_13] : memref<8x32xf32, #tpu.memory_space<vmem>>, vector<1x32xf32>
    tpu.vector_store %arg10[%28, %c0_13], %27 {strides = array<i32>} : memref<8x32xf32, #tpu.memory_space<vmem>>, vector<1x32xf32>,
    %c1_i32 = arith.constant 1 : i32
    %30 = arith.index_cast %c1_i32 : i32 to index
    %c0_14 = arith.constant 0 : index
    %31 = vector.load %arg9[%30, %c0_14] : memref<8x128xf32, #tpu.memory_space<vmem>>, vector<1x128xf32>
    %cst_15 = arith.constant dense<0.000000e+00> : vector<1x128xf32>
    %32 = tpu.matmul %27, %8, %cst_15 {dimension_numbers = #tpu.dot_dimension_numbers<[1], [0], [0], [1], [0, 0, 1, 1], [], []>} : vector<1x32xf32>, vector<32x128xf32>, vector<1x128xf32> -> vector<1x128xf32>
    %33 = arith.addf %31, %32 : vector<1x128xf32>
    %34 = arith.negf %33 : vector<1x128xf32>
    %35 = math.exp %34 : vector<1x128xf32>
    %cst_16 = arith.constant 1.000000e+00 : f32
    %36 = vector.broadcast %cst_16 : f32 to vector<1x128xf32>
    %37 = arith.addf %36, %35 : vector<1x128xf32>
    %38 = arith.divf %36, %37 : vector<1x128xf32>
    %39 = math.tanh %33 : vector<1x128xf32>
    %40 = vector.extract_strided_slice %38 {offsets = [0, 0], sizes = [1, 32], strides = [1, 1]} : vector<1x128xf32> to vector<1x32xf32>
    %41 = vector.extract_strided_slice %38 {offsets = [0, 32], sizes = [1, 32], strides = [1, 1]} : vector<1x128xf32> to vector<1x32xf32>
    %42 = vector.extract_strided_slice %39 {offsets = [0, 64], sizes = [1, 32], strides = [1, 1]} : vector<1x128xf32> to vector<1x32xf32>
    %43 = vector.extract_strided_slice %38 {offsets = [0, 96], sizes = [1, 32], strides = [1, 1]} : vector<1x128xf32> to vector<1x32xf32>
    %44 = arith.mulf %41, %25 : vector<1x32xf32>
    %45 = arith.mulf %40, %42 : vector<1x32xf32>
    %46 = arith.addf %44, %45 : vector<1x32xf32>
    %47 = math.tanh %46 : vector<1x32xf32>
    %48 = arith.mulf %43, %47 : vector<1x32xf32>
    %49 = arith.index_cast %c1_i32 : i32 to index
    %c0_17 = arith.constant 0 : index
    %50 = vector.load %arg10[%49, %c0_17] : memref<8x32xf32, #tpu.memory_space<vmem>>, vector<1x32xf32>
    tpu.vector_store %arg10[%49, %c0_17], %48 {strides = array<i32>} : memref<8x32xf32, #tpu.memory_space<vmem>>, vector<1x32xf32>,
    %c2_i32 = arith.constant 2 : i32
    %51 = arith.index_cast %c2_i32 : i32 to index
    %c0_18 = arith.constant 0 : index
    %52 = vector.load %arg9[%51, %c0_18] : memref<8x128xf32, #tpu.memory_space<vmem>>, vector<1x128xf32>
    %cst_19 = arith.constant dense<0.000000e+00> : vector<1x128xf32>
    %53 = tpu.matmul %48, %8, %cst_19 {dimension_numbers = #tpu.dot_dimension_numbers<[1], [0], [0], [1], [0, 0, 1, 1], [], []>} : vector<1x32xf32>, vector<32x128xf32>, vector<1x128xf32> -> vector<1x128xf32>
    %54 = arith.addf %52, %53 : vector<1x128xf32>
    %55 = arith.negf %54 : vector<1x128xf32>
    %56 = math.exp %55 : vector<1x128xf32>
    %cst_20 = arith.constant 1.000000e+00 : f32
    %57 = vector.broadcast %cst_20 : f32 to vector<1x128xf32>
    %58 = arith.addf %57, %56 : vector<1x128xf32>
    %59 = arith.divf %57, %58 : vector<1x128xf32>
    %60 = math.tanh %54 : vector<1x128xf32>
    %61 = vector.extract_strided_slice %59 {offsets = [0, 0], sizes = [1, 32], strides = [1, 1]} : vector<1x128xf32> to vector<1x32xf32>
    %62 = vector.extract_strided_slice %59 {offsets = [0, 32], sizes = [1, 32], strides = [1, 1]} : vector<1x128xf32> to vector<1x32xf32>
    %63 = vector.extract_strided_slice %60 {offsets = [0, 64], sizes = [1, 32], strides = [1, 1]} : vector<1x128xf32> to vector<1x32xf32>
    %64 = vector.extract_strided_slice %59 {offsets = [0, 96], sizes = [1, 32], strides = [1, 1]} : vector<1x128xf32> to vector<1x32xf32>
    %65 = arith.mulf %62, %46 : vector<1x32xf32>
    %66 = arith.mulf %61, %63 : vector<1x32xf32>
    %67 = arith.addf %65, %66 : vector<1x32xf32>
    %68 = math.tanh %67 : vector<1x32xf32>
    %69 = arith.mulf %64, %68 : vector<1x32xf32>
    %70 = arith.index_cast %c2_i32 : i32 to index
    %c0_21 = arith.constant 0 : index
    %71 = vector.load %arg10[%70, %c0_21] : memref<8x32xf32, #tpu.memory_space<vmem>>, vector<1x32xf32>
    tpu.vector_store %arg10[%70, %c0_21], %69 {strides = array<i32>} : memref<8x32xf32, #tpu.memory_space<vmem>>, vector<1x32xf32>,
    %c3_i32 = arith.constant 3 : i32
    %72 = arith.index_cast %c3_i32 : i32 to index
    %c0_22 = arith.constant 0 : index
    %73 = vector.load %arg9[%72, %c0_22] : memref<8x128xf32, #tpu.memory_space<vmem>>, vector<1x128xf32>
    %cst_23 = arith.constant dense<0.000000e+00> : vector<1x128xf32>
    %74 = tpu.matmul %69, %8, %cst_23 {dimension_numbers = #tpu.dot_dimension_numbers<[1], [0], [0], [1], [0, 0, 1, 1], [], []>} : vector<1x32xf32>, vector<32x128xf32>, vector<1x128xf32> -> vector<1x128xf32>
    %75 = arith.addf %73, %74 : vector<1x128xf32>
    %76 = arith.negf %75 : vector<1x128xf32>
    %77 = math.exp %76 : vector<1x128xf32>
    %cst_24 = arith.constant 1.000000e+00 : f32
    %78 = vector.broadcast %cst_24 : f32 to vector<1x128xf32>
    %79 = arith.addf %78, %77 : vector<1x128xf32>
    %80 = arith.divf %78, %79 : vector<1x128xf32>
    %81 = math.tanh %75 : vector<1x128xf32>
    %82 = vector.extract_strided_slice %80 {offsets = [0, 0], sizes = [1, 32], strides = [1, 1]} : vector<1x128xf32> to vector<1x32xf32>
    %83 = vector.extract_strided_slice %80 {offsets = [0, 32], sizes = [1, 32], strides = [1, 1]} : vector<1x128xf32> to vector<1x32xf32>
    %84 = vector.extract_strided_slice %81 {offsets = [0, 64], sizes = [1, 32], strides = [1, 1]} : vector<1x128xf32> to vector<1x32xf32>
    %85 = vector.extract_strided_slice %80 {offsets = [0, 96], sizes = [1, 32], strides = [1, 1]} : vector<1x128xf32> to vector<1x32xf32>
    %86 = arith.mulf %83, %67 : vector<1x32xf32>
    %87 = arith.mulf %82, %84 : vector<1x32xf32>
    %88 = arith.addf %86, %87 : vector<1x32xf32>
    %89 = math.tanh %88 : vector<1x32xf32>
    %90 = arith.mulf %85, %89 : vector<1x32xf32>
    %91 = arith.index_cast %c3_i32 : i32 to index
    %c0_25 = arith.constant 0 : index
    %92 = vector.load %arg10[%91, %c0_25] : memref<8x32xf32, #tpu.memory_space<vmem>>, vector<1x32xf32>
    tpu.vector_store %arg10[%91, %c0_25], %90 {strides = array<i32>} : memref<8x32xf32, #tpu.memory_space<vmem>>, vector<1x32xf32>,
    %c4_i32 = arith.constant 4 : i32
    %93 = arith.index_cast %c4_i32 : i32 to index
    %c0_26 = arith.constant 0 : index
    %94 = vector.load %arg9[%93, %c0_26] : memref<8x128xf32, #tpu.memory_space<vmem>>, vector<1x128xf32>
    %cst_27 = arith.constant dense<0.000000e+00> : vector<1x128xf32>
    %95 = tpu.matmul %90, %8, %cst_27 {dimension_numbers = #tpu.dot_dimension_numbers<[1], [0], [0], [1], [0, 0, 1, 1], [], []>} : vector<1x32xf32>, vector<32x128xf32>, vector<1x128xf32> -> vector<1x128xf32>
    %96 = arith.addf %94, %95 : vector<1x128xf32>
    %97 = arith.negf %96 : vector<1x128xf32>
    %98 = math.exp %97 : vector<1x128xf32>
    %cst_28 = arith.constant 1.000000e+00 : f32
    %99 = vector.broadcast %cst_28 : f32 to vector<1x128xf32>
    %100 = arith.addf %99, %98 : vector<1x128xf32>
    %101 = arith.divf %99, %100 : vector<1x128xf32>
    %102 = math.tanh %96 : vector<1x128xf32>
    %103 = vector.extract_strided_slice %101 {offsets = [0, 0], sizes = [1, 32], strides = [1, 1]} : vector<1x128xf32> to vector<1x32xf32>
    %104 = vector.extract_strided_slice %101 {offsets = [0, 32], sizes = [1, 32], strides = [1, 1]} : vector<1x128xf32> to vector<1x32xf32>
    %105 = vector.extract_strided_slice %102 {offsets = [0, 64], sizes = [1, 32], strides = [1, 1]} : vector<1x128xf32> to vector<1x32xf32>
    %106 = vector.extract_strided_slice %101 {offsets = [0, 96], sizes = [1, 32], strides = [1, 1]} : vector<1x128xf32> to vector<1x32xf32>
    %107 = arith.mulf %104, %88 : vector<1x32xf32>
    %108 = arith.mulf %103, %105 : vector<1x32xf32>
    %109 = arith.addf %107, %108 : vector<1x32xf32>
    %110 = math.tanh %109 : vector<1x32xf32>
    %111 = arith.mulf %106, %110 : vector<1x32xf32>
    %112 = arith.index_cast %c4_i32 : i32 to index
    %c0_29 = arith.constant 0 : index
    %113 = vector.load %arg10[%112, %c0_29] : memref<8x32xf32, #tpu.memory_space<vmem>>, vector<1x32xf32>
    tpu.vector_store %arg10[%112, %c0_29], %111 {strides = array<i32>} : memref<8x32xf32, #tpu.memory_space<vmem>>, vector<1x32xf32>,
    %c5_i32 = arith.constant 5 : i32
    %114 = arith.index_cast %c5_i32 : i32 to index
    %c0_30 = arith.constant 0 : index
    %115 = vector.load %arg9[%114, %c0_30] : memref<8x128xf32, #tpu.memory_space<vmem>>, vector<1x128xf32>
    %cst_31 = arith.constant dense<0.000000e+00> : vector<1x128xf32>
    %116 = tpu.matmul %111, %8, %cst_31 {dimension_numbers = #tpu.dot_dimension_numbers<[1], [0], [0], [1], [0, 0, 1, 1], [], []>} : vector<1x32xf32>, vector<32x128xf32>, vector<1x128xf32> -> vector<1x128xf32>
    %117 = arith.addf %115, %116 : vector<1x128xf32>
    %118 = arith.negf %117 : vector<1x128xf32>
    %119 = math.exp %118 : vector<1x128xf32>
    %cst_32 = arith.constant 1.000000e+00 : f32
    %120 = vector.broadcast %cst_32 : f32 to vector<1x128xf32>
    %121 = arith.addf %120, %119 : vector<1x128xf32>
    %122 = arith.divf %120, %121 : vector<1x128xf32>
    %123 = math.tanh %117 : vector<1x128xf32>
    %124 = vector.extract_strided_slice %122 {offsets = [0, 0], sizes = [1, 32], strides = [1, 1]} : vector<1x128xf32> to vector<1x32xf32>
    %125 = vector.extract_strided_slice %122 {offsets = [0, 32], sizes = [1, 32], strides = [1, 1]} : vector<1x128xf32> to vector<1x32xf32>
    %126 = vector.extract_strided_slice %123 {offsets = [0, 64], sizes = [1, 32], strides = [1, 1]} : vector<1x128xf32> to vector<1x32xf32>
    %127 = vector.extract_strided_slice %122 {offsets = [0, 96], sizes = [1, 32], strides = [1, 1]} : vector<1x128xf32> to vector<1x32xf32>
    %128 = arith.mulf %125, %109 : vector<1x32xf32>
    %129 = arith.mulf %124, %126 : vector<1x32xf32>
    %130 = arith.addf %128, %129 : vector<1x32xf32>
    %131 = math.tanh %130 : vector<1x32xf32>
    %132 = arith.mulf %127, %131 : vector<1x32xf32>
    %133 = arith.index_cast %c5_i32 : i32 to index
    %c0_33 = arith.constant 0 : index
    %134 = vector.load %arg10[%133, %c0_33] : memref<8x32xf32, #tpu.memory_space<vmem>>, vector<1x32xf32>
    tpu.vector_store %arg10[%133, %c0_33], %132 {strides = array<i32>} : memref<8x32xf32, #tpu.memory_space<vmem>>, vector<1x32xf32>,
    %c6_i32 = arith.constant 6 : i32
    %135 = arith.index_cast %c6_i32 : i32 to index
    %c0_34 = arith.constant 0 : index
    %136 = vector.load %arg9[%135, %c0_34] : memref<8x128xf32, #tpu.memory_space<vmem>>, vector<1x128xf32>
    %cst_35 = arith.constant dense<0.000000e+00> : vector<1x128xf32>
    %137 = tpu.matmul %132, %8, %cst_35 {dimension_numbers = #tpu.dot_dimension_numbers<[1], [0], [0], [1], [0, 0, 1, 1], [], []>} : vector<1x32xf32>, vector<32x128xf32>, vector<1x128xf32> -> vector<1x128xf32>
    %138 = arith.addf %136, %137 : vector<1x128xf32>
    %139 = arith.negf %138 : vector<1x128xf32>
    %140 = math.exp %139 : vector<1x128xf32>
    %cst_36 = arith.constant 1.000000e+00 : f32
    %141 = vector.broadcast %cst_36 : f32 to vector<1x128xf32>
    %142 = arith.addf %141, %140 : vector<1x128xf32>
    %143 = arith.divf %141, %142 : vector<1x128xf32>
    %144 = math.tanh %138 : vector<1x128xf32>
    %145 = vector.extract_strided_slice %143 {offsets = [0, 0], sizes = [1, 32], strides = [1, 1]} : vector<1x128xf32> to vector<1x32xf32>
    %146 = vector.extract_strided_slice %143 {offsets = [0, 32], sizes = [1, 32], strides = [1, 1]} : vector<1x128xf32> to vector<1x32xf32>
    %147 = vector.extract_strided_slice %144 {offsets = [0, 64], sizes = [1, 32], strides = [1, 1]} : vector<1x128xf32> to vector<1x32xf32>
    %148 = vector.extract_strided_slice %143 {offsets = [0, 96], sizes = [1, 32], strides = [1, 1]} : vector<1x128xf32> to vector<1x32xf32>
    %149 = arith.mulf %146, %130 : vector<1x32xf32>
    %150 = arith.mulf %145, %147 : vector<1x32xf32>
    %151 = arith.addf %149, %150 : vector<1x32xf32>
    %152 = math.tanh %151 : vector<1x32xf32>
    %153 = arith.mulf %148, %152 : vector<1x32xf32>
    %154 = arith.index_cast %c6_i32 : i32 to index
    %c0_37 = arith.constant 0 : index
    %155 = vector.load %arg10[%154, %c0_37] : memref<8x32xf32, #tpu.memory_space<vmem>>, vector<1x32xf32>
    tpu.vector_store %arg10[%154, %c0_37], %153 {strides = array<i32>} : memref<8x32xf32, #tpu.memory_space<vmem>>, vector<1x32xf32>,
    %c7_i32 = arith.constant 7 : i32
    %156 = arith.index_cast %c7_i32 : i32 to index
    %c0_38 = arith.constant 0 : index
    %157 = vector.load %arg9[%156, %c0_38] : memref<8x128xf32, #tpu.memory_space<vmem>>, vector<1x128xf32>
    %cst_39 = arith.constant dense<0.000000e+00> : vector<1x128xf32>
    %158 = tpu.matmul %153, %8, %cst_39 {dimension_numbers = #tpu.dot_dimension_numbers<[1], [0], [0], [1], [0, 0, 1, 1], [], []>} : vector<1x32xf32>, vector<32x128xf32>, vector<1x128xf32> -> vector<1x128xf32>
    %159 = arith.addf %157, %158 : vector<1x128xf32>
    %160 = arith.negf %159 : vector<1x128xf32>
    %161 = math.exp %160 : vector<1x128xf32>
    %cst_40 = arith.constant 1.000000e+00 : f32
    %162 = vector.broadcast %cst_40 : f32 to vector<1x128xf32>
    %163 = arith.addf %162, %161 : vector<1x128xf32>
    %164 = arith.divf %162, %163 : vector<1x128xf32>
    %165 = math.tanh %159 : vector<1x128xf32>
    %166 = vector.extract_strided_slice %164 {offsets = [0, 0], sizes = [1, 32], strides = [1, 1]} : vector<1x128xf32> to vector<1x32xf32>
    %167 = vector.extract_strided_slice %164 {offsets = [0, 32], sizes = [1, 32], strides = [1, 1]} : vector<1x128xf32> to vector<1x32xf32>
    %168 = vector.extract_strided_slice %165 {offsets = [0, 64], sizes = [1, 32], strides = [1, 1]} : vector<1x128xf32> to vector<1x32xf32>
    %169 = vector.extract_strided_slice %164 {offsets = [0, 96], sizes = [1, 32], strides = [1, 1]} : vector<1x128xf32> to vector<1x32xf32>
    %170 = arith.mulf %167, %151 : vector<1x32xf32>
    %171 = arith.mulf %166, %168 : vector<1x32xf32>
    %172 = arith.addf %170, %171 : vector<1x32xf32>
    %173 = math.tanh %172 : vector<1x32xf32>
    %174 = arith.mulf %169, %173 : vector<1x32xf32>
    %175 = arith.index_cast %c7_i32 : i32 to index
    %c0_41 = arith.constant 0 : index
    %176 = vector.load %arg10[%175, %c0_41] : memref<8x32xf32, #tpu.memory_space<vmem>>, vector<1x32xf32>
    tpu.vector_store %arg10[%175, %c0_41], %174 {strides = array<i32>} : memref<8x32xf32, #tpu.memory_space<vmem>>, vector<1x32xf32>,
    %c8_i32 = arith.constant 8 : i32
    %c0_42 = arith.constant 0 : index
    %c0_43 = arith.constant 0 : index
    %177 = vector.load %arg10[%c0_42, %c0_43] : memref<8x32xf32, #tpu.memory_space<vmem>>, vector<8x32xf32>
    %c0_44 = arith.constant 0 : index
    %c0_45 = arith.constant 0 : index
    %178 = vector.load %arg4[%c0_44, %c0_45] : memref<32x128xf32, #tpu.memory_space<vmem>>, vector<32x128xf32>
    %cst_46 = arith.constant dense<0.000000e+00> : vector<8x128xf32>
    %179 = tpu.matmul %177, %178, %cst_46 {dimension_numbers = #tpu.dot_dimension_numbers<[1], [0], [0], [1], [0, 0, 1, 1], [], []>} : vector<8x32xf32>, vector<32x128xf32>, vector<8x128xf32> -> vector<8x128xf32>
    %c0_47 = arith.constant 0 : index
    %c0_48 = arith.constant 0 : index
    %180 = vector.load %arg6[%c0_47, %c0_48] : memref<1x128xf32, #tpu.memory_space<vmem>>, vector<1x128xf32>
    %181 = vector.broadcast %180 : vector<1x128xf32> to vector<8x128xf32>
    %182 = arith.addf %179, %181 : vector<8x128xf32>
    %c0_49 = arith.constant 0 : index
    %c0_50 = arith.constant 0 : index
    %183 = vector.load %arg9[%c0_49, %c0_50] : memref<8x128xf32, #tpu.memory_space<vmem>>, vector<8x128xf32>
    tpu.vector_store %arg9[%c0_49, %c0_50], %182 {strides = array<i32>} : memref<8x128xf32, #tpu.memory_space<vmem>>, vector<8x128xf32>,
    %c0_51 = arith.constant 0 : index
    %c0_52 = arith.constant 0 : index
    %184 = vector.load %arg5[%c0_51, %c0_52] : memref<32x128xf32, #tpu.memory_space<vmem>>, vector<32x128xf32>
    %c0_i32_53 = arith.constant 0 : i32
    %185 = arith.index_cast %c0_i32_53 : i32 to index
    %c0_54 = arith.constant 0 : index
    %186 = vector.load %arg9[%185, %c0_54] : memref<8x128xf32, #tpu.memory_space<vmem>>, vector<1x128xf32>
    %cst_55 = arith.constant dense<0.000000e+00> : vector<1x128xf32>
    %187 = tpu.matmul %0, %184, %cst_55 {dimension_numbers = #tpu.dot_dimension_numbers<[1], [0], [0], [1], [0, 0, 1, 1], [], []>} : vector<1x32xf32>, vector<32x128xf32>, vector<1x128xf32> -> vector<1x128xf32>
    %188 = arith.addf %186, %187 : vector<1x128xf32>
    %189 = arith.negf %188 : vector<1x128xf32>
    %190 = math.exp %189 : vector<1x128xf32>
    %cst_56 = arith.constant 1.000000e+00 : f32
    %191 = vector.broadcast %cst_56 : f32 to vector<1x128xf32>
    %192 = arith.addf %191, %190 : vector<1x128xf32>
    %193 = arith.divf %191, %192 : vector<1x128xf32>
    %194 = math.tanh %188 : vector<1x128xf32>
    %195 = vector.extract_strided_slice %193 {offsets = [0, 0], sizes = [1, 32], strides = [1, 1]} : vector<1x128xf32> to vector<1x32xf32>
    %196 = vector.extract_strided_slice %193 {offsets = [0, 32], sizes = [1, 32], strides = [1, 1]} : vector<1x128xf32> to vector<1x32xf32>
    %197 = vector.extract_strided_slice %194 {offsets = [0, 64], sizes = [1, 32], strides = [1, 1]} : vector<1x128xf32> to vector<1x32xf32>
    %198 = vector.extract_strided_slice %193 {offsets = [0, 96], sizes = [1, 32], strides = [1, 1]} : vector<1x128xf32> to vector<1x32xf32>
    %199 = arith.mulf %196, %0 : vector<1x32xf32>
    %200 = arith.mulf %195, %197 : vector<1x32xf32>
    %201 = arith.addf %199, %200 : vector<1x32xf32>
    %202 = math.tanh %201 : vector<1x32xf32>
    %203 = arith.mulf %198, %202 : vector<1x32xf32>
    %c1_i32_57 = arith.constant 1 : i32
    %204 = arith.index_cast %c1_i32_57 : i32 to index
    %c0_58 = arith.constant 0 : index
    %205 = vector.load %arg9[%204, %c0_58] : memref<8x128xf32, #tpu.memory_space<vmem>>, vector<1x128xf32>
    %cst_59 = arith.constant dense<0.000000e+00> : vector<1x128xf32>
    %206 = tpu.matmul %203, %184, %cst_59 {dimension_numbers = #tpu.dot_dimension_numbers<[1], [0], [0], [1], [0, 0, 1, 1], [], []>} : vector<1x32xf32>, vector<32x128xf32>, vector<1x128xf32> -> vector<1x128xf32>
    %207 = arith.addf %205, %206 : vector<1x128xf32>
    %208 = arith.negf %207 : vector<1x128xf32>
    %209 = math.exp %208 : vector<1x128xf32>
    %cst_60 = arith.constant 1.000000e+00 : f32
    %210 = vector.broadcast %cst_60 : f32 to vector<1x128xf32>
    %211 = arith.addf %210, %209 : vector<1x128xf32>
    %212 = arith.divf %210, %211 : vector<1x128xf32>
    %213 = math.tanh %207 : vector<1x128xf32>
    %214 = vector.extract_strided_slice %212 {offsets = [0, 0], sizes = [1, 32], strides = [1, 1]} : vector<1x128xf32> to vector<1x32xf32>
    %215 = vector.extract_strided_slice %212 {offsets = [0, 32], sizes = [1, 32], strides = [1, 1]} : vector<1x128xf32> to vector<1x32xf32>
    %216 = vector.extract_strided_slice %213 {offsets = [0, 64], sizes = [1, 32], strides = [1, 1]} : vector<1x128xf32> to vector<1x32xf32>
    %217 = vector.extract_strided_slice %212 {offsets = [0, 96], sizes = [1, 32], strides = [1, 1]} : vector<1x128xf32> to vector<1x32xf32>
    %218 = arith.mulf %215, %201 : vector<1x32xf32>
    %219 = arith.mulf %214, %216 : vector<1x32xf32>
    %220 = arith.addf %218, %219 : vector<1x32xf32>
    %221 = math.tanh %220 : vector<1x32xf32>
    %222 = arith.mulf %217, %221 : vector<1x32xf32>
    %c2_i32_61 = arith.constant 2 : i32
    %223 = arith.index_cast %c2_i32_61 : i32 to index
    %c0_62 = arith.constant 0 : index
    %224 = vector.load %arg9[%223, %c0_62] : memref<8x128xf32, #tpu.memory_space<vmem>>, vector<1x128xf32>
    %cst_63 = arith.constant dense<0.000000e+00> : vector<1x128xf32>
    %225 = tpu.matmul %222, %184, %cst_63 {dimension_numbers = #tpu.dot_dimension_numbers<[1], [0], [0], [1], [0, 0, 1, 1], [], []>} : vector<1x32xf32>, vector<32x128xf32>, vector<1x128xf32> -> vector<1x128xf32>
    %226 = arith.addf %224, %225 : vector<1x128xf32>
    %227 = arith.negf %226 : vector<1x128xf32>
    %228 = math.exp %227 : vector<1x128xf32>
    %cst_64 = arith.constant 1.000000e+00 : f32
    %229 = vector.broadcast %cst_64 : f32 to vector<1x128xf32>
    %230 = arith.addf %229, %228 : vector<1x128xf32>
    %231 = arith.divf %229, %230 : vector<1x128xf32>
    %232 = math.tanh %226 : vector<1x128xf32>
    %233 = vector.extract_strided_slice %231 {offsets = [0, 0], sizes = [1, 32], strides = [1, 1]} : vector<1x128xf32> to vector<1x32xf32>
    %234 = vector.extract_strided_slice %231 {offsets = [0, 32], sizes = [1, 32], strides = [1, 1]} : vector<1x128xf32> to vector<1x32xf32>
    %235 = vector.extract_strided_slice %232 {offsets = [0, 64], sizes = [1, 32], strides = [1, 1]} : vector<1x128xf32> to vector<1x32xf32>
    %236 = vector.extract_strided_slice %231 {offsets = [0, 96], sizes = [1, 32], strides = [1, 1]} : vector<1x128xf32> to vector<1x32xf32>
    %237 = arith.mulf %234, %220 : vector<1x32xf32>
    %238 = arith.mulf %233, %235 : vector<1x32xf32>
    %239 = arith.addf %237, %238 : vector<1x32xf32>
    %240 = math.tanh %239 : vector<1x32xf32>
    %241 = arith.mulf %236, %240 : vector<1x32xf32>
    %c3_i32_65 = arith.constant 3 : i32
    %242 = arith.index_cast %c3_i32_65 : i32 to index
    %c0_66 = arith.constant 0 : index
    %243 = vector.load %arg9[%242, %c0_66] : memref<8x128xf32, #tpu.memory_space<vmem>>, vector<1x128xf32>
    %cst_67 = arith.constant dense<0.000000e+00> : vector<1x128xf32>
    %244 = tpu.matmul %241, %184, %cst_67 {dimension_numbers = #tpu.dot_dimension_numbers<[1], [0], [0], [1], [0, 0, 1, 1], [], []>} : vector<1x32xf32>, vector<32x128xf32>, vector<1x128xf32> -> vector<1x128xf32>
    %245 = arith.addf %243, %244 : vector<1x128xf32>
    %246 = arith.negf %245 : vector<1x128xf32>
    %247 = math.exp %246 : vector<1x128xf32>
    %cst_68 = arith.constant 1.000000e+00 : f32
    %248 = vector.broadcast %cst_68 : f32 to vector<1x128xf32>
    %249 = arith.addf %248, %247 : vector<1x128xf32>
    %250 = arith.divf %248, %249 : vector<1x128xf32>
    %251 = math.tanh %245 : vector<1x128xf32>
    %252 = vector.extract_strided_slice %250 {offsets = [0, 0], sizes = [1, 32], strides = [1, 1]} : vector<1x128xf32> to vector<1x32xf32>
    %253 = vector.extract_strided_slice %250 {offsets = [0, 32], sizes = [1, 32], strides = [1, 1]} : vector<1x128xf32> to vector<1x32xf32>
    %254 = vector.extract_strided_slice %251 {offsets = [0, 64], sizes = [1, 32], strides = [1, 1]} : vector<1x128xf32> to vector<1x32xf32>
    %255 = vector.extract_strided_slice %250 {offsets = [0, 96], sizes = [1, 32], strides = [1, 1]} : vector<1x128xf32> to vector<1x32xf32>
    %256 = arith.mulf %253, %239 : vector<1x32xf32>
    %257 = arith.mulf %252, %254 : vector<1x32xf32>
    %258 = arith.addf %256, %257 : vector<1x32xf32>
    %259 = math.tanh %258 : vector<1x32xf32>
    %260 = arith.mulf %255, %259 : vector<1x32xf32>
    %c4_i32_69 = arith.constant 4 : i32
    %261 = arith.index_cast %c4_i32_69 : i32 to index
    %c0_70 = arith.constant 0 : index
    %262 = vector.load %arg9[%261, %c0_70] : memref<8x128xf32, #tpu.memory_space<vmem>>, vector<1x128xf32>
    %cst_71 = arith.constant dense<0.000000e+00> : vector<1x128xf32>
    %263 = tpu.matmul %260, %184, %cst_71 {dimension_numbers = #tpu.dot_dimension_numbers<[1], [0], [0], [1], [0, 0, 1, 1], [], []>} : vector<1x32xf32>, vector<32x128xf32>, vector<1x128xf32> -> vector<1x128xf32>
    %264 = arith.addf %262, %263 : vector<1x128xf32>
    %265 = arith.negf %264 : vector<1x128xf32>
    %266 = math.exp %265 : vector<1x128xf32>
    %cst_72 = arith.constant 1.000000e+00 : f32
    %267 = vector.broadcast %cst_72 : f32 to vector<1x128xf32>
    %268 = arith.addf %267, %266 : vector<1x128xf32>
    %269 = arith.divf %267, %268 : vector<1x128xf32>
    %270 = math.tanh %264 : vector<1x128xf32>
    %271 = vector.extract_strided_slice %269 {offsets = [0, 0], sizes = [1, 32], strides = [1, 1]} : vector<1x128xf32> to vector<1x32xf32>
    %272 = vector.extract_strided_slice %269 {offsets = [0, 32], sizes = [1, 32], strides = [1, 1]} : vector<1x128xf32> to vector<1x32xf32>
    %273 = vector.extract_strided_slice %270 {offsets = [0, 64], sizes = [1, 32], strides = [1, 1]} : vector<1x128xf32> to vector<1x32xf32>
    %274 = vector.extract_strided_slice %269 {offsets = [0, 96], sizes = [1, 32], strides = [1, 1]} : vector<1x128xf32> to vector<1x32xf32>
    %275 = arith.mulf %272, %258 : vector<1x32xf32>
    %276 = arith.mulf %271, %273 : vector<1x32xf32>
    %277 = arith.addf %275, %276 : vector<1x32xf32>
    %278 = math.tanh %277 : vector<1x32xf32>
    %279 = arith.mulf %274, %278 : vector<1x32xf32>
    %c5_i32_73 = arith.constant 5 : i32
    %280 = arith.index_cast %c5_i32_73 : i32 to index
    %c0_74 = arith.constant 0 : index
    %281 = vector.load %arg9[%280, %c0_74] : memref<8x128xf32, #tpu.memory_space<vmem>>, vector<1x128xf32>
    %cst_75 = arith.constant dense<0.000000e+00> : vector<1x128xf32>
    %282 = tpu.matmul %279, %184, %cst_75 {dimension_numbers = #tpu.dot_dimension_numbers<[1], [0], [0], [1], [0, 0, 1, 1], [], []>} : vector<1x32xf32>, vector<32x128xf32>, vector<1x128xf32> -> vector<1x128xf32>
    %283 = arith.addf %281, %282 : vector<1x128xf32>
    %284 = arith.negf %283 : vector<1x128xf32>
    %285 = math.exp %284 : vector<1x128xf32>
    %cst_76 = arith.constant 1.000000e+00 : f32
    %286 = vector.broadcast %cst_76 : f32 to vector<1x128xf32>
    %287 = arith.addf %286, %285 : vector<1x128xf32>
    %288 = arith.divf %286, %287 : vector<1x128xf32>
    %289 = math.tanh %283 : vector<1x128xf32>
    %290 = vector.extract_strided_slice %288 {offsets = [0, 0], sizes = [1, 32], strides = [1, 1]} : vector<1x128xf32> to vector<1x32xf32>
    %291 = vector.extract_strided_slice %288 {offsets = [0, 32], sizes = [1, 32], strides = [1, 1]} : vector<1x128xf32> to vector<1x32xf32>
    %292 = vector.extract_strided_slice %289 {offsets = [0, 64], sizes = [1, 32], strides = [1, 1]} : vector<1x128xf32> to vector<1x32xf32>
    %293 = vector.extract_strided_slice %288 {offsets = [0, 96], sizes = [1, 32], strides = [1, 1]} : vector<1x128xf32> to vector<1x32xf32>
    %294 = arith.mulf %291, %277 : vector<1x32xf32>
    %295 = arith.mulf %290, %292 : vector<1x32xf32>
    %296 = arith.addf %294, %295 : vector<1x32xf32>
    %297 = math.tanh %296 : vector<1x32xf32>
    %298 = arith.mulf %293, %297 : vector<1x32xf32>
    %c6_i32_77 = arith.constant 6 : i32
    %299 = arith.index_cast %c6_i32_77 : i32 to index
    %c0_78 = arith.constant 0 : index
    %300 = vector.load %arg9[%299, %c0_78] : memref<8x128xf32, #tpu.memory_space<vmem>>, vector<1x128xf32>
    %cst_79 = arith.constant dense<0.000000e+00> : vector<1x128xf32>
    %301 = tpu.matmul %298, %184, %cst_79 {dimension_numbers = #tpu.dot_dimension_numbers<[1], [0], [0], [1], [0, 0, 1, 1], [], []>} : vector<1x32xf32>, vector<32x128xf32>, vector<1x128xf32> -> vector<1x128xf32>
    %302 = arith.addf %300, %301 : vector<1x128xf32>
    %303 = arith.negf %302 : vector<1x128xf32>
    %304 = math.exp %303 : vector<1x128xf32>
    %cst_80 = arith.constant 1.000000e+00 : f32
    %305 = vector.broadcast %cst_80 : f32 to vector<1x128xf32>
    %306 = arith.addf %305, %304 : vector<1x128xf32>
    %307 = arith.divf %305, %306 : vector<1x128xf32>
    %308 = math.tanh %302 : vector<1x128xf32>
    %309 = vector.extract_strided_slice %307 {offsets = [0, 0], sizes = [1, 32], strides = [1, 1]} : vector<1x128xf32> to vector<1x32xf32>
    %310 = vector.extract_strided_slice %307 {offsets = [0, 32], sizes = [1, 32], strides = [1, 1]} : vector<1x128xf32> to vector<1x32xf32>
    %311 = vector.extract_strided_slice %308 {offsets = [0, 64], sizes = [1, 32], strides = [1, 1]} : vector<1x128xf32> to vector<1x32xf32>
    %312 = vector.extract_strided_slice %307 {offsets = [0, 96], sizes = [1, 32], strides = [1, 1]} : vector<1x128xf32> to vector<1x32xf32>
    %313 = arith.mulf %310, %296 : vector<1x32xf32>
    %314 = arith.mulf %309, %311 : vector<1x32xf32>
    %315 = arith.addf %313, %314 : vector<1x32xf32>
    %316 = math.tanh %315 : vector<1x32xf32>
    %317 = arith.mulf %312, %316 : vector<1x32xf32>
    %c7_i32_81 = arith.constant 7 : i32
    %318 = arith.index_cast %c7_i32_81 : i32 to index
    %c0_82 = arith.constant 0 : index
    %319 = vector.load %arg9[%318, %c0_82] : memref<8x128xf32, #tpu.memory_space<vmem>>, vector<1x128xf32>
    %cst_83 = arith.constant dense<0.000000e+00> : vector<1x128xf32>
    %320 = tpu.matmul %317, %184, %cst_83 {dimension_numbers = #tpu.dot_dimension_numbers<[1], [0], [0], [1], [0, 0, 1, 1], [], []>} : vector<1x32xf32>, vector<32x128xf32>, vector<1x128xf32> -> vector<1x128xf32>
    %321 = arith.addf %319, %320 : vector<1x128xf32>
    %322 = arith.negf %321 : vector<1x128xf32>
    %323 = math.exp %322 : vector<1x128xf32>
    %cst_84 = arith.constant 1.000000e+00 : f32
    %324 = vector.broadcast %cst_84 : f32 to vector<1x128xf32>
    %325 = arith.addf %324, %323 : vector<1x128xf32>
    %326 = arith.divf %324, %325 : vector<1x128xf32>
    %327 = math.tanh %321 : vector<1x128xf32>
    %328 = vector.extract_strided_slice %326 {offsets = [0, 0], sizes = [1, 32], strides = [1, 1]} : vector<1x128xf32> to vector<1x32xf32>
    %329 = vector.extract_strided_slice %326 {offsets = [0, 32], sizes = [1, 32], strides = [1, 1]} : vector<1x128xf32> to vector<1x32xf32>
    %330 = vector.extract_strided_slice %327 {offsets = [0, 64], sizes = [1, 32], strides = [1, 1]} : vector<1x128xf32> to vector<1x32xf32>
    %331 = vector.extract_strided_slice %326 {offsets = [0, 96], sizes = [1, 32], strides = [1, 1]} : vector<1x128xf32> to vector<1x32xf32>
    %332 = arith.mulf %329, %315 : vector<1x32xf32>
    %333 = arith.mulf %328, %330 : vector<1x32xf32>
    %334 = arith.addf %332, %333 : vector<1x32xf32>
    %335 = math.tanh %334 : vector<1x32xf32>
    %336 = arith.mulf %331, %335 : vector<1x32xf32>
    %c8_i32_85 = arith.constant 8 : i32
    %c0_86 = arith.constant 0 : index
    %c0_87 = arith.constant 0 : index
    %337 = vector.load %arg7[%c0_86, %c0_87] : memref<2x32xf32, #tpu.memory_space<vmem>>, vector<1x32xf32>
    tpu.vector_store %arg7[%c0_86, %c0_87], %174 {strides = array<i32>} : memref<2x32xf32, #tpu.memory_space<vmem>>, vector<1x32xf32>,
    %c1 = arith.constant 1 : index
    %c0_88 = arith.constant 0 : index
    %338 = vector.load %arg7[%c1, %c0_88] : memref<2x32xf32, #tpu.memory_space<vmem>>, vector<1x32xf32>
    tpu.vector_store %arg7[%c1, %c0_88], %336 {strides = array<i32>} : memref<2x32xf32, #tpu.memory_space<vmem>>, vector<1x32xf32>,
    %c0_89 = arith.constant 0 : index
    %c0_90 = arith.constant 0 : index
    %339 = vector.load %arg8[%c0_89, %c0_90] : memref<2x32xf32, #tpu.memory_space<vmem>>, vector<1x32xf32>
    tpu.vector_store %arg8[%c0_89, %c0_90], %172 {strides = array<i32>} : memref<2x32xf32, #tpu.memory_space<vmem>>, vector<1x32xf32>,
    %c1_91 = arith.constant 1 : index
    %c0_92 = arith.constant 0 : index
    %340 = vector.load %arg8[%c1_91, %c0_92] : memref<2x32xf32, #tpu.memory_space<vmem>>, vector<1x32xf32>
    tpu.vector_store %arg8[%c1_91, %c0_92], %334 {strides = array<i32>} : memref<2x32xf32, #tpu.memory_space<vmem>>, vector<1x32xf32>,
    return
  }
}

</mosaic_0001>

<llo_original>
// kernel: tpu_custom_call.1
$region0: #{tpu_custom_call.1}
  #allocation0 [shape = 'u32[]', space=smem, size = 0x4, offset = 0x4, fixed_abs, tag = 'smem constant byte address 0x4 - core index']
  #allocation1 [shape = 'u32[144,128]{1,0:T(1,128)}', space=vmem, size = 0x12000, scoped, tag = 'internal scratch']
  #allocation2 [shape = 'f32[8,128]{1,0:T(8,128)}', space=vmem, size = 0x1000, scoped, tag = 'scratch operand']
  #allocation3 [shape = 'f32[8,32]{1,0:T(8,128)}', space=vmem, size = 0x1000, scoped, tag = 'scratch operand']
  %s0 = inlined_call_operand.hbm [shape: f32[8,32], index: 0, kind: input, shape index: {}]
  %s1 = inlined_call_operand.hbm [shape: f32[32,128], index: 1, kind: input, shape index: {}]
  %s2 = inlined_call_operand.hbm [shape: f32[32,128], index: 2, kind: input, shape index: {}]
  %s3 = inlined_call_operand.vmem [shape: f32[1,128], index: 3, kind: input, shape index: {}]
  %s4 = inlined_call_operand.hbm [shape: f32[32,128], index: 4, kind: input, shape index: {}]
  %s5 = inlined_call_operand.hbm [shape: f32[32,128], index: 5, kind: input, shape index: {}]
  %s6 = inlined_call_operand.vmem [shape: f32[1,128], index: 6, kind: input, shape index: {}]
  %s7 = inlined_call_operand.hbm [shape: f32[2,32], index: 7, kind: output, shape index: {0}]
  %s8 = inlined_call_operand.hbm [shape: f32[2,32], index: 8, kind: output, shape index: {1}]
  %9 = xla_tuple %s7, %s8
  %s10 = sld [smem:[#allocation0]]
  $region66: #{tpu_custom_call.1} parent=0
    _
  %s12 = ssub.s32 1, %s10
  %s13 = scalar_select 0, %s12, %s10
  $region1: #{tpu_custom_call.1} parent=0
    #allocation4 [shape = 'u8[4096]{0}', space=vmem, size = 0x1000, scoped, tag = 'input window, operand 0, single buffered']
    #allocation5 [shape = 's32[1]{0}', space=sflag, size = 0x4, scoped, tag = 'scoped memory for tpu_custom_call.1']
    #allocation6 [shape = 's32[1]{0}', space=sflag, size = 0x4, scoped, tag = 'scoped memory for tpu_custom_call.1']
    #allocation7 [shape = 'u8[16384]{0}', space=vmem, size = 0x4000, scoped, tag = 'input window, operand 1, single buffered']
    #allocation8 [shape = 's32[1]{0}', space=sflag, size = 0x4, scoped, tag = 'scoped memory for tpu_custom_call.1']
    #allocation9 [shape = 'u8[16384]{0}', space=vmem, size = 0x4000, scoped, tag = 'input window, operand 2, single buffered']
    #allocation10 [shape = 'u8[16384]{0}', space=vmem, size = 0x4000, scoped, tag = 'input window, operand 4, single buffered']
    #allocation11 [shape = 's32[1]{0}', space=sflag, size = 0x4, scoped, tag = 'scoped memory for tpu_custom_call.1']
    #allocation12 [shape = 'u8[16384]{0}', space=vmem, size = 0x4000, scoped, tag = 'input window, operand 5, single buffered']
    #allocation13 [shape = 'u8[1024]{0}', space=vmem, size = 0x400, scoped, tag = 'output window, operand 0, single buffered']
    #allocation14 [shape = 'u8[1024]{0}', space=vmem, size = 0x400, scoped, tag = 'output window, operand 1, single buffered']
    #allocation15 [shape = 's32[1]{0}', space=sflag, size = 0x4, scoped, tag = 'scoped memory for tpu_custom_call.1']
    %14 = vsyncpa [#allocation5], 0
    %15 = vsyncpa [#allocation8], 0
    %16 = vsyncpa [#allocation11], 0
    %17 = vsyncpa [#allocation6], 0
    %18 = vsyncpa [#allocation15], 0
    // Predicated region
    $region2: #{tpu_custom_call.1} parent=1 // pred_check
      _
    $region3: #{tpu_custom_call.1} parent=1 // pred_check_branch
      %20 = sbr.rel (0) target = $region5
    $region4: #{tpu_custom_call.1} parent=1 // pred_region
      %s22 = ssub.s32 128, 128
      %23 = vsyncadd [#allocation5], %s22
      %s25 = sshll.u32 [#allocation4], 4
      %s26 = int_to_ptr.vmem [resolvable:$true] %s25
      %28 = dma.hbm_to_vmem [thread:$0]  %s0, 128, %s26, [#allocation5]
    $region5: #{tpu_custom_call.1} parent=1 // pred_fallthru
      _
    // Predicated region
    $region6: #{tpu_custom_call.1} parent=1 // pred_check
      _
    $region7: #{tpu_custom_call.1} parent=1 // pred_check_branch
      %30 = sbr.rel (0) target = $region9
    $region8: #{tpu_custom_call.1} parent=1 // pred_region
      %s32 = ssub.s32 512, 512
      %33 = vsyncadd [#allocation8], %s32
      %s34 = sshll.u32 [#allocation7], 4
      %s35 = int_to_ptr.vmem [resolvable:$true] %s34
      %40 = dma.hbm_to_vmem [thread:$0]  %s1, 512, %s35, [#allocation8], 128, 128, 8
    $region9: #{tpu_custom_call.1} parent=1 // pred_fallthru
      _
    // Predicated region
    $region10: #{tpu_custom_call.1} parent=1 // pred_check
      _
    $region11: #{tpu_custom_call.1} parent=1 // pred_check_branch
      %42 = sbr.rel (0) target = $region13
    $region12: #{tpu_custom_call.1} parent=1 // pred_region
      %s44 = ssub.s32 512, 512
      %45 = vsyncadd [#allocation8], %s44
      %s46 = sshll.u32 [#allocation9], 4
      %s47 = int_to_ptr.vmem [resolvable:$true] %s46
      %52 = dma.hbm_to_vmem [thread:$0]  %s2, 512, %s47, [#allocation8], 128, 128, 8
    $region13: #{tpu_custom_call.1} parent=1 // pred_fallthru
      _
    // Predicated region
    $region14: #{tpu_custom_call.1} parent=1 // pred_check
      _
    $region15: #{tpu_custom_call.1} parent=1 // pred_check_branch
      %54 = sbr.rel (0) target = $region17
    $region16: #{tpu_custom_call.1} parent=1 // pred_region
      _
    $region17: #{tpu_custom_call.1} parent=1 // pred_fallthru
      _
    // Predicated region
    $region18: #{tpu_custom_call.1} parent=1 // pred_check
      _
    $region19: #{tpu_custom_call.1} parent=1 // pred_check_branch
      %56 = sbr.rel (0) target = $region21
    $region20: #{tpu_custom_call.1} parent=1 // pred_region
      %s58 = ssub.s32 512, 512
      %59 = vsyncadd [#allocation11], %s58
      %s60 = sshll.u32 [#allocation10], 4
      %s61 = int_to_ptr.vmem [resolvable:$true] %s60
      %66 = dma.hbm_to_vmem [thread:$0]  %s4, 512, %s61, [#allocation11], 128, 128, 8
    $region21: #{tpu_custom_call.1} parent=1 // pred_fallthru
      _
    // Predicated region
    $region22: #{tpu_custom_call.1} parent=1 // pred_check
      _
    $region23: #{tpu_custom_call.1} parent=1 // pred_check_branch
      %68 = sbr.rel (0) target = $region25
    $region24: #{tpu_custom_call.1} parent=1 // pred_region
      %s70 = ssub.s32 512, 512
      %71 = vsyncadd [#allocation11], %s70
      %s72 = sshll.u32 [#allocation12], 4
      %s73 = int_to_ptr.vmem [resolvable:$true] %s72
      %78 = dma.hbm_to_vmem [thread:$0]  %s5, 512, %s73, [#allocation11], 128, 128, 8
    $region25: #{tpu_custom_call.1} parent=1 // pred_fallthru
      _
    // Predicated region
    $region26: #{tpu_custom_call.1} parent=1 // pred_check
      _
    $region27: #{tpu_custom_call.1} parent=1 // pred_check_branch
      %80 = sbr.rel (0) target = $region29
    $region28: #{tpu_custom_call.1} parent=1 // pred_region
      _
    $region29: #{tpu_custom_call.1} parent=1 // pred_fallthru
      _
    // Predicated region
    $region30: #{tpu_custom_call.1} parent=1 // pred_check
      _
    $region31: #{tpu_custom_call.1} parent=1 // pred_check_branch
      %82 = sbr.rel (0) target = $region33
    $region32: #{tpu_custom_call.1} parent=1 // pred_region
      %83 = dma.done [#allocation5], 128
    $region33: #{tpu_custom_call.1} parent=1 // pred_fallthru
      _
    // Predicated region
    $region34: #{tpu_custom_call.1} parent=1 // pred_check
      _
    $region35: #{tpu_custom_call.1} parent=1 // pred_check_branch
      %85 = sbr.rel (0) target = $region37
    $region36: #{tpu_custom_call.1} parent=1 // pred_region
      %86 = dma.done [#allocation8], 512
    $region37: #{tpu_custom_call.1} parent=1 // pred_fallthru
      _
    // Predicated region
    $region38: #{tpu_custom_call.1} parent=1 // pred_check
      _
    $region39: #{tpu_custom_call.1} parent=1 // pred_check_branch
      %88 = sbr.rel (0) target = $region41
    $region40: #{tpu_custom_call.1} parent=1 // pred_region
      %89 = dma.done [#allocation8], 512
    $region41: #{tpu_custom_call.1} parent=1 // pred_fallthru
      _
    // Predicated region
    $region42: #{tpu_custom_call.1} parent=1 // pred_check
      _
    $region43: #{tpu_custom_call.1} parent=1 // pred_check_branch
      %91 = sbr.rel (0) target = $region45
    $region44: #{tpu_custom_call.1} parent=1 // pred_region
      %92 = dma.done [#allocation11], 512
    $region45: #{tpu_custom_call.1} parent=1 // pred_fallthru
      _
    // Predicated region
    $region46: #{tpu_custom_call.1} parent=1 // pred_check
      _
    $region47: #{tpu_custom_call.1} parent=1 // pred_check_branch
      %94 = sbr.rel (0) target = $region49
    $region48: #{tpu_custom_call.1} parent=1 // pred_region
      %95 = dma.done [#allocation11], 512
    $region49: #{tpu_custom_call.1} parent=1 // pred_fallthru
      _
    %v96 = vld [vmem:[#allocation4] sm:$0xff]
    %v97 = vld [vmem:[#allocation7] sm:$0xff]
    %v98 = vld [vmem:[#allocation7 + $0x8] sm:$0xff]
    %v99 = vld [vmem:[#allocation7 + $0x10] sm:$0xff]
    %v100 = vld [vmem:[#allocation7 + $0x18] sm:$0xff]
    %v101 = vld [vmem:[%s3] sm:$0x1]
    %v103 = vlaneseq
    %v104 = vshrl.u32 %v103, 7
    %v105 = vsub.s32 0, %v104
    %v106 = vrot.slane %v101, %v105
    %vm108 = vcmask 261120
    %v110 = vsel %vm108, %v96, 0
    %112 = vmatprep.subr.mxu0 0.0
    %113 = vmatpush1.msra.mxu0 0.0
    %114 = vmatprep.subr.mxu0 0.0
    %115 = vmatpush1.msra.mxu0 0.0
    %116 = vmatprep.subr.mxu0 0.0
    %117 = vmatpush1.msra.mxu0 0.0
    %118 = vmatprep.subr.mxu0 0.0
    %119 = vmatpush1.msra.mxu0 0.0
    %120 = vmatprep.subr.mxu0 0.0
    %121 = vmatpush1.msra.mxu0 0.0
    %122 = vmatprep.subr.mxu0 0.0
    %123 = vmatpush1.msra.mxu0 0.0
    %124 = vmatprep.subr.mxu0 0.0
    %125 = vmatpush1.msra.mxu0 0.0
    %126 = vmatprep.subr.mxu0 0.0
    %127 = vmatpush1.msra.mxu0 0.0
    %128 = vmatprep.subr.mxu0 0.0
    %129 = vmatpush1.msra.mxu0 0.0
    %130 = vmatprep.subr.mxu0 0.0
    %131 = vmatpush1.msra.mxu0 0.0
    %132 = vmatprep.subr.mxu0 0.0
    %133 = vmatpush1.msra.mxu0 0.0
    %134 = vmatprep.subr.mxu0 0.0
    %135 = vmatpush1.msra.mxu0 0.0
    %136 = vmatprep.subr.mxu0 0.0
    %137 = vmatpush1.msra.mxu0 %v100
    %138 = vmatprep.subr.mxu0 0.0
    %139 = vmatpush1.msra.mxu0 %v99
    %140 = vmatprep.subr.mxu0 0.0
    %141 = vmatpush1.msra.mxu0 %v98
    %142 = vmatprep.subr.mxu0 0.0
    %143 = vmatpush1.msra.mxu0 %v97
    %144 = vmatprep.subr.mxu0 0.0
    %145 = vmatpush2.msra.mxu0 0.0
    %146 = vmatprep.subr.mxu0 0.0
    %147 = vmatpush2.msra.mxu0 0.0
    %148 = vmatprep.subr.mxu0 0.0
    %149 = vmatpush2.msra.mxu0 0.0
    %150 = vmatprep.subr.mxu0 0.0
    %151 = vmatpush2.msra.mxu0 0.0
    %152 = vmatprep.subr.mxu0 0.0
    %153 = vmatpush2.msra.mxu0 0.0
    %154 = vmatprep.subr.mxu0 0.0
    %155 = vmatpush2.msra.mxu0 0.0
    %156 = vmatprep.subr.mxu0 0.0
    %157 = vmatpush2.msra.mxu0 0.0
    %158 = vmatprep.subr.mxu0 0.0
    %159 = vmatpush2.msra.mxu0 0.0
    %160 = vmatprep.subr.mxu0 0.0
    %161 = vmatpush2.msra.mxu0 0.0
    %162 = vmatprep.subr.mxu0 0.0
    %163 = vmatpush2.msra.mxu0 0.0
    %164 = vmatprep.subr.mxu0 0.0
    %165 = vmatpush2.msra.mxu0 0.0
    %166 = vmatprep.subr.mxu0 0.0
    %167 = vmatpush2.msra.mxu0 0.0
    %168 = vmatprep.subr.mxu0 0.0
    %169 = vmatpush2.msra.mxu0 0.0
    %170 = vmatprep.subr.mxu0 0.0
    %171 = vmatpush2.msra.mxu0 0.0
    %172 = vmatprep.subr.mxu0 0.0
    %173 = vmatpush2.msra.mxu0 0.0
    %174 = vmatprep.subr.mxu0 0.0
    %175 = vmatpush2.msra.mxu0 0.0
    %176 = vmatprep.mubr.f32.mxu0 0.0
    %177 = vmatmul.mubr.f32.gmra.mxu0 %v110
    %v178 = vpop.f32.mrf.mxu0
    %v179 = vadd.f32 %v106, %v178
    %v180 = vpop.f32.mrf.mxu0
    %181 = vdwg.mxu0
    %182 = vst [vmem:[#allocation2] sm:$0xff] %v179
    %v183 = vld [vmem:[#allocation9] sm:$0xff]
    %v184 = vld [vmem:[#allocation9 + $0x8] sm:$0xff]
    %v185 = vld [vmem:[#allocation9 + $0x10] sm:$0xff]
    %v186 = vld [vmem:[#allocation9 + $0x18] sm:$0xff]
    %v187 = vld [vmem:[#allocation2] sm:$0x1]
    %v189 = vsel %vm108, 0.0, 0
    %191 = vmatprep.subr.mxu0 0.0
    %192 = vmatpush1.msra.mxu0 0.0
    %193 = vmatprep.subr.mxu0 0.0
    %194 = vmatpush1.msra.mxu0 0.0
    %195 = vmatprep.subr.mxu0 0.0
    %196 = vmatpush1.msra.mxu0 0.0
    %197 = vmatprep.subr.mxu0 0.0
    %198 = vmatpush1.msra.mxu0 0.0
    %199 = vmatprep.subr.mxu0 0.0
    %200 = vmatpush1.msra.mxu0 0.0
    %201 = vmatprep.subr.mxu0 0.0
    %202 = vmatpush1.msra.mxu0 0.0
    %203 = vmatprep.subr.mxu0 0.0
    %204 = vmatpush1.msra.mxu0 0.0
    %205 = vmatprep.subr.mxu0 0.0
    %206 = vmatpush1.msra.mxu0 0.0
    %207 = vmatprep.subr.mxu0 0.0
    %208 = vmatpush1.msra.mxu0 0.0
    %209 = vmatprep.subr.mxu0 0.0
    %210 = vmatpush1.msra.mxu0 0.0
    %211 = vmatprep.subr.mxu0 0.0
    %212 = vmatpush1.msra.mxu0 0.0
    %213 = vmatprep.subr.mxu0 0.0
    %214 = vmatpush1.msra.mxu0 0.0
    %215 = vmatprep.subr.mxu0 0.0
    %216 = vmatpush1.msra.mxu0 %v186
    %217 = vmatprep.subr.mxu0 0.0
    %218 = vmatpush1.msra.mxu0 %v185
    %219 = vmatprep.subr.mxu0 0.0
    %220 = vmatpush1.msra.mxu0 %v184
    %221 = vmatprep.subr.mxu0 0.0
    %222 = vmatpush1.msra.mxu0 %v183
    %223 = vmatprep.subr.mxu0 0.0
    %224 = vmatpush2.msra.mxu0 0.0
    %225 = vmatprep.subr.mxu0 0.0
    %226 = vmatpush2.msra.mxu0 0.0
    %227 = vmatprep.subr.mxu0 0.0
    %228 = vmatpush2.msra.mxu0 0.0
    %229 = vmatprep.subr.mxu0 0.0
    %230 = vmatpush2.msra.mxu0 0.0
    %231 = vmatprep.subr.mxu0 0.0
    %232 = vmatpush2.msra.mxu0 0.0
    %233 = vmatprep.subr.mxu0 0.0
    %234 = vmatpush2.msra.mxu0 0.0
    %235 = vmatprep.subr.mxu0 0.0
    %236 = vmatpush2.msra.mxu0 0.0
    %237 = vmatprep.subr.mxu0 0.0
    %238 = vmatpush2.msra.mxu0 0.0
    %239 = vmatprep.subr.mxu0 0.0
    %240 = vmatpush2.msra.mxu0 0.0
    %241 = vmatprep.subr.mxu0 0.0
    %242 = vmatpush2.msra.mxu0 0.0
    %243 = vmatprep.subr.mxu0 0.0
    %244 = vmatpush2.msra.mxu0 0.0
    %245 = vmatprep.subr.mxu0 0.0
    %246 = vmatpush2.msra.mxu0 0.0
    %247 = vmatprep.subr.mxu0 0.0
    %248 = vmatpush2.msra.mxu0 0.0
    %249 = vmatprep.subr.mxu0 0.0
    %250 = vmatpush2.msra.mxu0 0.0
    %251 = vmatprep.subr.mxu0 0.0
    %252 = vmatpush2.msra.mxu0 0.0
    %253 = vmatprep.subr.mxu0 0.0
    %254 = vmatpush2.msra.mxu0 0.0
    %255 = vmatprep.mubr.f32.mxu0 0.0
    %256 = vmatmul.mubr.f32.gmra.mxu0 %v189
    %v257 = vpop.f32.mrf.mxu0
    %v258 = vadd.f32 0.0, %v257
    %v259 = vpop.f32.mrf.mxu0
    %260 = vdwg.mxu0
    %v261 = vadd.f32 %v187, %v258
    %v262 = vxor.u32 %v261, 2147483648
    %v263 = vmul.f32 %v262, 1.442695
    %v264 = vpow.pop %v263
    %v265 = vadd.f32 %v264, 1.0
    %v266 = vrcp.pop %v265
    %v267 = vmul.f32 1.0, %v266
    %v268 = vtanh.pop %v261
    %v269 = vmul.f32 %v267, 0.0
    %271 = vrot.lane.b32.xlu0 %v268, 64
    %v272 = vpop.permute.xlu0 %271
    %v274 = vmul.f32 %v267, %v272
    %276 = vrot.lane.b32.xlu0 %v274, 32
    %v277 = vpop.permute.xlu0 %276
    %v279 = vadd.f32 %v269, %v277
    %v280 = vtanh.pop %v279
    %282 = vrot.lane.b32.xlu0 %v280, 64
    %v283 = vpop.permute.xlu0 %282
    %v285 = vmul.f32 %v267, %v283
    %287 = vrot.lane.b32.xlu0 %v285, 32
    %v288 = vpop.permute.xlu0 %287
    %vm290 = vcmask 253952
    %291 = vst.msk [vmem:[#allocation3] sm:$0x1] %vm290, %v288
    %v292 = vld [vmem:[#allocation2 + $0x1] sm:$0x1]
    %v293 = vsel %vm108, %v288, 0
    %295 = vmatprep.subr.mxu0 0.0
    %296 = vmatpush1.msra.mxu0 0.0
    %297 = vmatprep.subr.mxu0 0.0
    %298 = vmatpush1.msra.mxu0 0.0
    %299 = vmatprep.subr.mxu0 0.0
    %300 = vmatpush1.msra.mxu0 0.0
    %301 = vmatprep.subr.mxu0 0.0
    %302 = vmatpush1.msra.mxu0 0.0
    %303 = vmatprep.subr.mxu0 0.0
    %304 = vmatpush1.msra.mxu0 0.0
    %305 = vmatprep.subr.mxu0 0.0
    %306 = vmatpush1.msra.mxu0 0.0
    %307 = vmatprep.subr.mxu0 0.0
    %308 = vmatpush1.msra.mxu0 0.0
    %309 = vmatprep.subr.mxu0 0.0
    %310 = vmatpush1.msra.mxu0 0.0
    %311 = vmatprep.subr.mxu0 0.0
    %312 = vmatpush1.msra.mxu0 0.0
    %313 = vmatprep.subr.mxu0 0.0
    %314 = vmatpush1.msra.mxu0 0.0
    %315 = vmatprep.subr.mxu0 0.0
    %316 = vmatpush1.msra.mxu0 0.0
    %317 = vmatprep.subr.mxu0 0.0
    %318 = vmatpush1.msra.mxu0 0.0
    %319 = vmatprep.subr.mxu0 0.0
    %320 = vmatpush1.msra.mxu0 %v186
    %321 = vmatprep.subr.mxu0 0.0
    %322 = vmatpush1.msra.mxu0 %v185
    %323 = vmatprep.subr.mxu0 0.0
    %324 = vmatpush1.msra.mxu0 %v184
    %325 = vmatprep.subr.mxu0 0.0
    %326 = vmatpush1.msra.mxu0 %v183
    %327 = vmatprep.subr.mxu0 0.0
    %328 = vmatpush2.msra.mxu0 0.0
    %329 = vmatprep.subr.mxu0 0.0
    %330 = vmatpush2.msra.mxu0 0.0
    %331 = vmatprep.subr.mxu0 0.0
    %332 = vmatpush2.msra.mxu0 0.0
    %333 = vmatprep.subr.mxu0 0.0
    %334 = vmatpush2.msra.mxu0 0.0
    %335 = vmatprep.subr.mxu0 0.0
    %336 = vmatpush2.msra.mxu0 0.0
    %337 = vmatprep.subr.mxu0 0.0
    %338 = vmatpush2.msra.mxu0 0.0
    %339 = vmatprep.subr.mxu0 0.0
    %340 = vmatpush2.msra.mxu0 0.0
    %341 = vmatprep.subr.mxu0 0.0
    %342 = vmatpush2.msra.mxu0 0.0
    %343 = vmatprep.subr.mxu0 0.0
    %344 = vmatpush2.msra.mxu0 0.0
    %345 = vmatprep.subr.mxu0 0.0
    %346 = vmatpush2.msra.mxu0 0.0
    %347 = vmatprep.subr.mxu0 0.0
    %348 = vmatpush2.msra.mxu0 0.0
    %349 = vmatprep.subr.mxu0 0.0
    %350 = vmatpush2.msra.mxu0 0.0
    %351 = vmatprep.subr.mxu0 0.0
    %352 = vmatpush2.msra.mxu0 0.0
    %353 = vmatprep.subr.mxu0 0.0
    %354 = vmatpush2.msra.mxu0 0.0
    %355 = vmatprep.subr.mxu0 0.0
    %356 = vmatpush2.msra.mxu0 0.0
    %357 = vmatprep.subr.mxu0 0.0
    %358 = vmatpush2.msra.mxu0 0.0
    %359 = vmatprep.mubr.f32.mxu0 0.0
    %360 = vmatmul.mubr.f32.gmra.mxu0 %v293
    %v361 = vpop.f32.mrf.mxu0
    %v362 = vadd.f32 0.0, %v361
    %v363 = vpop.f32.mrf.mxu0
    %364 = vdwg.mxu0
    %v365 = vadd.f32 %v292, %v362
    %v366 = vxor.u32 %v365, 2147483648
    %v367 = vmul.f32 %v366, 1.442695
    %v368 = vpow.pop %v367
    %v369 = vadd.f32 %v368, 1.0
    %v370 = vrcp.pop %v369
    %v371 = vmul.f32 1.0, %v370
    %v372 = vtanh.pop %v365
    %v373 = vmul.f32 %v371, %v279
    %375 = vrot.lane.b32.xlu0 %v372, 64
    %v376 = vpop.permute.xlu0 %375
    %v378 = vmul.f32 %v371, %v376
    %380 = vrot.lane.b32.xlu0 %v378, 32
    %v381 = vpop.permute.xlu0 %380
    %v383 = vadd.f32 %v373, %v381
    %v384 = vtanh.pop %v383
    %386 = vrot.lane.b32.xlu0 %v384, 64
    %v387 = vpop.permute.xlu0 %386
    %v389 = vmul.f32 %v371, %v387
    %391 = vrot.lane.b32.xlu0 %v389, 32
    %v392 = vpop.permute.xlu0 %391
    %394 = vst.msk [vmem:[#allocation3 + $0x1] sm:$0x1] %vm290, %v392
    %v395 = vld [vmem:[#allocation2 + $0x2] sm:$0x1]
    %v396 = vsel %vm108, %v392, 0
    %398 = vmatprep.subr.mxu0 0.0
    %399 = vmatpush1.msra.mxu0 0.0
    %400 = vmatprep.subr.mxu0 0.0
    %401 = vmatpush1.msra.mxu0 0.0
    %402 = vmatprep.subr.mxu0 0.0
    %403 = vmatpush1.msra.mxu0 0.0
    %404 = vmatprep.subr.mxu0 0.0
    %405 = vmatpush1.msra.mxu0 0.0
    %406 = vmatprep.subr.mxu0 0.0
    %407 = vmatpush1.msra.mxu0 0.0
    %408 = vmatprep.subr.mxu0 0.0
    %409 = vmatpush1.msra.mxu0 0.0
    %410 = vmatprep.subr.mxu0 0.0
    %411 = vmatpush1.msra.mxu0 0.0
    %412 = vmatprep.subr.mxu0 0.0
    %413 = vmatpush1.msra.mxu0 0.0
    %414 = vmatprep.subr.mxu0 0.0
    %415 = vmatpush1.msra.mxu0 0.0
    %416 = vmatprep.subr.mxu0 0.0
    %417 = vmatpush1.msra.mxu0 0.0
    %418 = vmatprep.subr.mxu0 0.0
    %419 = vmatpush1.msra.mxu0 0.0
    %420 = vmatprep.subr.mxu0 0.0
    %421 = vmatpush1.msra.mxu0 0.0
    %422 = vmatprep.subr.mxu0 0.0
    %423 = vmatpush1.msra.mxu0 %v186
    %424 = vmatprep.subr.mxu0 0.0
    %425 = vmatpush1.msra.mxu0 %v185
    %426 = vmatprep.subr.mxu0 0.0
    %427 = vmatpush1.msra.mxu0 %v184
    %428 = vmatprep.subr.mxu0 0.0
    %429 = vmatpush1.msra.mxu0 %v183
    %430 = vmatprep.subr.mxu0 0.0
    %431 = vmatpush2.msra.mxu0 0.0
    %432 = vmatprep.subr.mxu0 0.0
    %433 = vmatpush2.msra.mxu0 0.0
    %434 = vmatprep.subr.mxu0 0.0
    %435 = vmatpush2.msra.mxu0 0.0
    %436 = vmatprep.subr.mxu0 0.0
    %437 = vmatpush2.msra.mxu0 0.0
    %438 = vmatprep.subr.mxu0 0.0
    %439 = vmatpush2.msra.mxu0 0.0
    %440 = vmatprep.subr.mxu0 0.0
    %441 = vmatpush2.msra.mxu0 0.0
    %442 = vmatprep.subr.mxu0 0.0
    %443 = vmatpush2.msra.mxu0 0.0
    %444 = vmatprep.subr.mxu0 0.0
    %445 = vmatpush2.msra.mxu0 0.0
    %446 = vmatprep.subr.mxu0 0.0
    %447 = vmatpush2.msra.mxu0 0.0
    %448 = vmatprep.subr.mxu0 0.0
    %449 = vmatpush2.msra.mxu0 0.0
    %450 = vmatprep.subr.mxu0 0.0
    %451 = vmatpush2.msra.mxu0 0.0
    %452 = vmatprep.subr.mxu0 0.0
    %453 = vmatpush2.msra.mxu0 0.0
    %454 = vmatprep.subr.mxu0 0.0
    %455 = vmatpush2.msra.mxu0 0.0
    %456 = vmatprep.subr.mxu0 0.0
    %457 = vmatpush2.msra.mxu0 0.0
    %458 = vmatprep.subr.mxu0 0.0
    %459 = vmatpush2.msra.mxu0 0.0
    %460 = vmatprep.subr.mxu0 0.0
    %461 = vmatpush2.msra.mxu0 0.0
    %462 = vmatprep.mubr.f32.mxu0 0.0
    %463 = vmatmul.mubr.f32.gmra.mxu0 %v396
    %v464 = vpop.f32.mrf.mxu0
    %v465 = vadd.f32 0.0, %v464
    %v466 = vpop.f32.mrf.mxu0
    %467 = vdwg.mxu0
    %v468 = vadd.f32 %v395, %v465
    %v469 = vxor.u32 %v468, 2147483648
    %v470 = vmul.f32 %v469, 1.442695
    %v471 = vpow.pop %v470
    %v472 = vadd.f32 %v471, 1.0
    %v473 = vrcp.pop %v472
    %v474 = vmul.f32 1.0, %v473
    %v475 = vtanh.pop %v468
    %v476 = vmul.f32 %v474, %v383
    %478 = vrot.lane.b32.xlu0 %v475, 64
    %v479 = vpop.permute.xlu0 %478
    %v481 = vmul.f32 %v474, %v479
    %483 = vrot.lane.b32.xlu0 %v481, 32
    %v484 = vpop.permute.xlu0 %483
    %v486 = vadd.f32 %v476, %v484
    %v487 = vtanh.pop %v486
    %489 = vrot.lane.b32.xlu0 %v487, 64
    %v490 = vpop.permute.xlu0 %489
    %v492 = vmul.f32 %v474, %v490
    %494 = vrot.lane.b32.xlu0 %v492, 32
    %v495 = vpop.permute.xlu0 %494
    %497 = vst.msk [vmem:[#allocation3 + $0x2] sm:$0x1] %vm290, %v495
    %v498 = vld [vmem:[#allocation2 + $0x3] sm:$0x1]
    %v499 = vsel %vm108, %v495, 0
    %501 = vmatprep.subr.mxu0 0.0
    %502 = vmatpush1.msra.mxu0 0.0
    %503 = vmatprep.subr.mxu0 0.0
    %504 = vmatpush1.msra.mxu0 0.0
    %505 = vmatprep.subr.mxu0 0.0
    %506 = vmatpush1.msra.mxu0 0.0
    %507 = vmatprep.subr.mxu0 0.0
    %508 = vmatpush1.msra.mxu0 0.0
    %509 = vmatprep.subr.mxu0 0.0
    %510 = vmatpush1.msra.mxu0 0.0
    %511 = vmatprep.subr.mxu0 0.0
    %512 = vmatpush1.msra.mxu0 0.0
    %513 = vmatprep.subr.mxu0 0.0
    %514 = vmatpush1.msra.mxu0 0.0
    %515 = vmatprep.subr.mxu0 0.0
    %516 = vmatpush1.msra.mxu0 0.0
    %517 = vmatprep.subr.mxu0 0.0
    %518 = vmatpush1.msra.mxu0 0.0
    %519 = vmatprep.subr.mxu0 0.0
    %520 = vmatpush1.msra.mxu0 0.0
    %521 = vmatprep.subr.mxu0 0.0
    %522 = vmatpush1.msra.mxu0 0.0
    %523 = vmatprep.subr.mxu0 0.0
    %524 = vmatpush1.msra.mxu0 0.0
    %525 = vmatprep.subr.mxu0 0.0
    %526 = vmatpush1.msra.mxu0 %v186
    %527 = vmatprep.subr.mxu0 0.0
    %528 = vmatpush1.msra.mxu0 %v185
    %529 = vmatprep.subr.mxu0 0.0
    %530 = vmatpush1.msra.mxu0 %v184
    %531 = vmatprep.subr.mxu0 0.0
    %532 = vmatpush1.msra.mxu0 %v183
    %533 = vmatprep.subr.mxu0 0.0
    %534 = vmatpush2.msra.mxu0 0.0
    %535 = vmatprep.subr.mxu0 0.0
    %536 = vmatpush2.msra.mxu0 0.0
    %537 = vmatprep.subr.mxu0 0.0
    %538 = vmatpush2.msra.mxu0 0.0
    %539 = vmatprep.subr.mxu0 0.0
    %540 = vmatpush2.msra.mxu0 0.0
    %541 = vmatprep.subr.mxu0 0.0
    %542 = vmatpush2.msra.mxu0 0.0
    %543 = vmatprep.subr.mxu0 0.0
    %544 = vmatpush2.msra.mxu0 0.0
    %545 = vmatprep.subr.mxu0 0.0
    %546 = vmatpush2.msra.mxu0 0.0
    %547 = vmatprep.subr.mxu0 0.0
    %548 = vmatpush2.msra.mxu0 0.0
    %549 = vmatprep.subr.mxu0 0.0
    %550 = vmatpush2.msra.mxu0 0.0
    %551 = vmatprep.subr.mxu0 0.0
    %552 = vmatpush2.msra.mxu0 0.0
    %553 = vmatprep.subr.mxu0 0.0
    %554 = vmatpush2.msra.mxu0 0.0
    %555 = vmatprep.subr.mxu0 0.0
    %556 = vmatpush2.msra.mxu0 0.0
    %557 = vmatprep.subr.mxu0 0.0
    %558 = vmatpush2.msra.mxu0 0.0
    %559 = vmatprep.subr.mxu0 0.0
    %560 = vmatpush2.msra.mxu0 0.0
    %561 = vmatprep.subr.mxu0 0.0
    %562 = vmatpush2.msra.mxu0 0.0
    %563 = vmatprep.subr.mxu0 0.0
    %564 = vmatpush2.msra.mxu0 0.0
    %565 = vmatprep.mubr.f32.mxu0 0.0
    %566 = vmatmul.mubr.f32.gmra.mxu0 %v499
    %v567 = vpop.f32.mrf.mxu0
    %v568 = vadd.f32 0.0, %v567
    %v569 = vpop.f32.mrf.mxu0
    %570 = vdwg.mxu0
    %v571 = vadd.f32 %v498, %v568
    %v572 = vxor.u32 %v571, 2147483648
    %v573 = vmul.f32 %v572, 1.442695
    %v574 = vpow.pop %v573
    %v575 = vadd.f32 %v574, 1.0
    %v576 = vrcp.pop %v575
    %v577 = vmul.f32 1.0, %v576
    %v578 = vtanh.pop %v571
    %v579 = vmul.f32 %v577, %v486
    %581 = vrot.lane.b32.xlu0 %v578, 64
    %v582 = vpop.permute.xlu0 %581
    %v584 = vmul.f32 %v577, %v582
    %586 = vrot.lane.b32.xlu0 %v584, 32
    %v587 = vpop.permute.xlu0 %586
    %v589 = vadd.f32 %v579, %v587
    %v590 = vtanh.pop %v589
    %592 = vrot.lane.b32.xlu0 %v590, 64
    %v593 = vpop.permute.xlu0 %592
    %v595 = vmul.f32 %v577, %v593
    %597 = vrot.lane.b32.xlu0 %v595, 32
    %v598 = vpop.permute.xlu0 %597
    %600 = vst.msk [vmem:[#allocation3 + $0x3] sm:$0x1] %vm290, %v598
    %v601 = vld [vmem:[#allocation2 + $0x4] sm:$0x1]
    %v602 = vsel %vm108, %v598, 0
    %604 = vmatprep.subr.mxu0 0.0
    %605 = vmatpush1.msra.mxu0 0.0
    %606 = vmatprep.subr.mxu0 0.0
    %607 = vmatpush1.msra.mxu0 0.0
    %608 = vmatprep.subr.mxu0 0.0
    %609 = vmatpush1.msra.mxu0 0.0
    %610 = vmatprep.subr.mxu0 0.0
    %611 = vmatpush1.msra.mxu0 0.0
    %612 = vmatprep.subr.mxu0 0.0
    %613 = vmatpush1.msra.mxu0 0.0
    %614 = vmatprep.subr.mxu0 0.0
    %615 = vmatpush1.msra.mxu0 0.0
    %616 = vmatprep.subr.mxu0 0.0
    %617 = vmatpush1.msra.mxu0 0.0
    %618 = vmatprep.subr.mxu0 0.0
    %619 = vmatpush1.msra.mxu0 0.0
    %620 = vmatprep.subr.mxu0 0.0
    %621 = vmatpush1.msra.mxu0 0.0
    %622 = vmatprep.subr.mxu0 0.0
    %623 = vmatpush1.msra.mxu0 0.0
    %624 = vmatprep.subr.mxu0 0.0
    %625 = vmatpush1.msra.mxu0 0.0
    %626 = vmatprep.subr.mxu0 0.0
    %627 = vmatpush1.msra.mxu0 0.0
    %628 = vmatprep.subr.mxu0 0.0
    %629 = vmatpush1.msra.mxu0 %v186
    %630 = vmatprep.subr.mxu0 0.0
    %631 = vmatpush1.msra.mxu0 %v185
    %632 = vmatprep.subr.mxu0 0.0
    %633 = vmatpush1.msra.mxu0 %v184
    %634 = vmatprep.subr.mxu0 0.0
    %635 = vmatpush1.msra.mxu0 %v183
    %636 = vmatprep.subr.mxu0 0.0
    %637 = vmatpush2.msra.mxu0 0.0
    %638 = vmatprep.subr.mxu0 0.0
    %639 = vmatpush2.msra.mxu0 0.0
    %640 = vmatprep.subr.mxu0 0.0
    %641 = vmatpush2.msra.mxu0 0.0
    %642 = vmatprep.subr.mxu0 0.0
    %643 = vmatpush2.msra.mxu0 0.0
    %644 = vmatprep.subr.mxu0 0.0
    %645 = vmatpush2.msra.mxu0 0.0
    %646 = vmatprep.subr.mxu0 0.0
    %647 = vmatpush2.msra.mxu0 0.0
    %648 = vmatprep.subr.mxu0 0.0
    %649 = vmatpush2.msra.mxu0 0.0
    %650 = vmatprep.subr.mxu0 0.0
    %651 = vmatpush2.msra.mxu0 0.0
    %652 = vmatprep.subr.mxu0 0.0
    %653 = vmatpush2.msra.mxu0 0.0
    %654 = vmatprep.subr.mxu0 0.0
    %655 = vmatpush2.msra.mxu0 0.0
    %656 = vmatprep.subr.mxu0 0.0
    %657 = vmatpush2.msra.mxu0 0.0
    %658 = vmatprep.subr.mxu0 0.0
    %659 = vmatpush2.msra.mxu0 0.0
    %660 = vmatprep.subr.mxu0 0.0
    %661 = vmatpush2.msra.mxu0 0.0
    %662 = vmatprep.subr.mxu0 0.0
    %663 = vmatpush2.msra.mxu0 0.0
    %664 = vmatprep.subr.mxu0 0.0
    %665 = vmatpush2.msra.mxu0 0.0
    %666 = vmatprep.subr.mxu0 0.0
    %667 = vmatpush2.msra.mxu0 0.0
    %668 = vmatprep.mubr.f32.mxu0 0.0
    %669 = vmatmul.mubr.f32.gmra.mxu0 %v602
    %v670 = vpop.f32.mrf.mxu0
    %v671 = vadd.f32 0.0, %v670
    %v672 = vpop.f32.mrf.mxu0
    %673 = vdwg.mxu0
    %v674 = vadd.f32 %v601, %v671
    %v675 = vxor.u32 %v674, 2147483648
    %v676 = vmul.f32 %v675, 1.442695
    %v677 = vpow.pop %v676
    %v678 = vadd.f32 %v677, 1.0
    %v679 = vrcp.pop %v678
    %v680 = vmul.f32 1.0, %v679
    %v681 = vtanh.pop %v674
    %v682 = vmul.f32 %v680, %v589
    %684 = vrot.lane.b32.xlu0 %v681, 64
    %v685 = vpop.permute.xlu0 %684
    %v687 = vmul.f32 %v680, %v685
    %689 = vrot.lane.b32.xlu0 %v687, 32
    %v690 = vpop.permute.xlu0 %689
    %v692 = vadd.f32 %v682, %v690
    %v693 = vtanh.pop %v692
    %695 = vrot.lane.b32.xlu0 %v693, 64
    %v696 = vpop.permute.xlu0 %695
    %v698 = vmul.f32 %v680, %v696
    %700 = vrot.lane.b32.xlu0 %v698, 32
    %v701 = vpop.permute.xlu0 %700
    %703 = vst.msk [vmem:[#allocation3 + $0x4] sm:$0x1] %vm290, %v701
    %v704 = vld [vmem:[#allocation2 + $0x5] sm:$0x1]
    %v705 = vsel %vm108, %v701, 0
    %707 = vmatprep.subr.mxu0 0.0
    %708 = vmatpush1.msra.mxu0 0.0
    %709 = vmatprep.subr.mxu0 0.0
    %710 = vmatpush1.msra.mxu0 0.0
    %711 = vmatprep.subr.mxu0 0.0
    %712 = vmatpush1.msra.mxu0 0.0
    %713 = vmatprep.subr.mxu0 0.0
    %714 = vmatpush1.msra.mxu0 0.0
    %715 = vmatprep.subr.mxu0 0.0
    %716 = vmatpush1.msra.mxu0 0.0
    %717 = vmatprep.subr.mxu0 0.0
    %718 = vmatpush1.msra.mxu0 0.0
    %719 = vmatprep.subr.mxu0 0.0
    %720 = vmatpush1.msra.mxu0 0.0
    %721 = vmatprep.subr.mxu0 0.0
    %722 = vmatpush1.msra.mxu0 0.0
    %723 = vmatprep.subr.mxu0 0.0
    %724 = vmatpush1.msra.mxu0 0.0
    %725 = vmatprep.subr.mxu0 0.0
    %726 = vmatpush1.msra.mxu0 0.0
    %727 = vmatprep.subr.mxu0 0.0
    %728 = vmatpush1.msra.mxu0 0.0
    %729 = vmatprep.subr.mxu0 0.0
    %730 = vmatpush1.msra.mxu0 0.0
    %731 = vmatprep.subr.mxu0 0.0
    %732 = vmatpush1.msra.mxu0 %v186
    %733 = vmatprep.subr.mxu0 0.0
    %734 = vmatpush1.msra.mxu0 %v185
    %735 = vmatprep.subr.mxu0 0.0
    %736 = vmatpush1.msra.mxu0 %v184
    %737 = vmatprep.subr.mxu0 0.0
    %738 = vmatpush1.msra.mxu0 %v183
    %739 = vmatprep.subr.mxu0 0.0
    %740 = vmatpush2.msra.mxu0 0.0
    %741 = vmatprep.subr.mxu0 0.0
    %742 = vmatpush2.msra.mxu0 0.0
    %743 = vmatprep.subr.mxu0 0.0
    %744 = vmatpush2.msra.mxu0 0.0
    %745 = vmatprep.subr.mxu0 0.0
    %746 = vmatpush2.msra.mxu0 0.0
    %747 = vmatprep.subr.mxu0 0.0
    %748 = vmatpush2.msra.mxu0 0.0
    %749 = vmatprep.subr.mxu0 0.0
    %750 = vmatpush2.msra.mxu0 0.0
    %751 = vmatprep.subr.mxu0 0.0
    %752 = vmatpush2.msra.mxu0 0.0
    %753 = vmatprep.subr.mxu0 0.0
    %754 = vmatpush2.msra.mxu0 0.0
    %755 = vmatprep.subr.mxu0 0.0
    %756 = vmatpush2.msra.mxu0 0.0
    %757 = vmatprep.subr.mxu0 0.0
    %758 = vmatpush2.msra.mxu0 0.0
    %759 = vmatprep.subr.mxu0 0.0
    %760 = vmatpush2.msra.mxu0 0.0
    %761 = vmatprep.subr.mxu0 0.0
    %762 = vmatpush2.msra.mxu0 0.0
    %763 = vmatprep.subr.mxu0 0.0
    %764 = vmatpush2.msra.mxu0 0.0
    %765 = vmatprep.subr.mxu0 0.0
    %766 = vmatpush2.msra.mxu0 0.0
    %767 = vmatprep.subr.mxu0 0.0
    %768 = vmatpush2.msra.mxu0 0.0
    %769 = vmatprep.subr.mxu0 0.0
    %770 = vmatpush2.msra.mxu0 0.0
    %771 = vmatprep.mubr.f32.mxu0 0.0
    %772 = vmatmul.mubr.f32.gmra.mxu0 %v705
    %v773 = vpop.f32.mrf.mxu0
    %v774 = vadd.f32 0.0, %v773
    %v775 = vpop.f32.mrf.mxu0
    %776 = vdwg.mxu0
    %v777 = vadd.f32 %v704, %v774
    %v778 = vxor.u32 %v777, 2147483648
    %v779 = vmul.f32 %v778, 1.442695
    %v780 = vpow.pop %v779
    %v781 = vadd.f32 %v780, 1.0
    %v782 = vrcp.pop %v781
    %v783 = vmul.f32 1.0, %v782
    %v784 = vtanh.pop %v777
    %v785 = vmul.f32 %v783, %v692
    %787 = vrot.lane.b32.xlu0 %v784, 64
    %v788 = vpop.permute.xlu0 %787
    %v790 = vmul.f32 %v783, %v788
    %792 = vrot.lane.b32.xlu0 %v790, 32
    %v793 = vpop.permute.xlu0 %792
    %v795 = vadd.f32 %v785, %v793
    %v796 = vtanh.pop %v795
    %798 = vrot.lane.b32.xlu0 %v796, 64
    %v799 = vpop.permute.xlu0 %798
    %v801 = vmul.f32 %v783, %v799
    %803 = vrot.lane.b32.xlu0 %v801, 32
    %v804 = vpop.permute.xlu0 %803
    %806 = vst.msk [vmem:[#allocation3 + $0x5] sm:$0x1] %vm290, %v804
    %v807 = vld [vmem:[#allocation2 + $0x6] sm:$0x1]
    %v808 = vsel %vm108, %v804, 0
    %810 = vmatprep.subr.mxu0 0.0
    %811 = vmatpush1.msra.mxu0 0.0
    %812 = vmatprep.subr.mxu0 0.0
    %813 = vmatpush1.msra.mxu0 0.0
    %814 = vmatprep.subr.mxu0 0.0
    %815 = vmatpush1.msra.mxu0 0.0
    %816 = vmatprep.subr.mxu0 0.0
    %817 = vmatpush1.msra.mxu0 0.0
    %818 = vmatprep.subr.mxu0 0.0
    %819 = vmatpush1.msra.mxu0 0.0
    %820 = vmatprep.subr.mxu0 0.0
    %821 = vmatpush1.msra.mxu0 0.0
    %822 = vmatprep.subr.mxu0 0.0
    %823 = vmatpush1.msra.mxu0 0.0
    %824 = vmatprep.subr.mxu0 0.0
    %825 = vmatpush1.msra.mxu0 0.0
    %826 = vmatprep.subr.mxu0 0.0
    %827 = vmatpush1.msra.mxu0 0.0
    %828 = vmatprep.subr.mxu0 0.0
    %829 = vmatpush1.msra.mxu0 0.0
    %830 = vmatprep.subr.mxu0 0.0
    %831 = vmatpush1.msra.mxu0 0.0
    %832 = vmatprep.subr.mxu0 0.0
    %833 = vmatpush1.msra.mxu0 0.0
    %834 = vmatprep.subr.mxu0 0.0
    %835 = vmatpush1.msra.mxu0 %v186
    %836 = vmatprep.subr.mxu0 0.0
    %837 = vmatpush1.msra.mxu0 %v185
    %838 = vmatprep.subr.mxu0 0.0
    %839 = vmatpush1.msra.mxu0 %v184
    %840 = vmatprep.subr.mxu0 0.0
    %841 = vmatpush1.msra.mxu0 %v183
    %842 = vmatprep.subr.mxu0 0.0
    %843 = vmatpush2.msra.mxu0 0.0
    %844 = vmatprep.subr.mxu0 0.0
    %845 = vmatpush2.msra.mxu0 0.0
    %846 = vmatprep.subr.mxu0 0.0
    %847 = vmatpush2.msra.mxu0 0.0
    %848 = vmatprep.subr.mxu0 0.0
    %849 = vmatpush2.msra.mxu0 0.0
    %850 = vmatprep.subr.mxu0 0.0
    %851 = vmatpush2.msra.mxu0 0.0
    %852 = vmatprep.subr.mxu0 0.0
    %853 = vmatpush2.msra.mxu0 0.0
    %854 = vmatprep.subr.mxu0 0.0
    %855 = vmatpush2.msra.mxu0 0.0
    %856 = vmatprep.subr.mxu0 0.0
    %857 = vmatpush2.msra.mxu0 0.0
    %858 = vmatprep.subr.mxu0 0.0
    %859 = vmatpush2.msra.mxu0 0.0
    %860 = vmatprep.subr.mxu0 0.0
    %861 = vmatpush2.msra.mxu0 0.0
    %862 = vmatprep.subr.mxu0 0.0
    %863 = vmatpush2.msra.mxu0 0.0
    %864 = vmatprep.subr.mxu0 0.0
    %865 = vmatpush2.msra.mxu0 0.0
    %866 = vmatprep.subr.mxu0 0.0
    %867 = vmatpush2.msra.mxu0 0.0
    %868 = vmatprep.subr.mxu0 0.0
    %869 = vmatpush2.msra.mxu0 0.0
    %870 = vmatprep.subr.mxu0 0.0
    %871 = vmatpush2.msra.mxu0 0.0
    %872 = vmatprep.subr.mxu0 0.0
    %873 = vmatpush2.msra.mxu0 0.0
    %874 = vmatprep.mubr.f32.mxu0 0.0
    %875 = vmatmul.mubr.f32.gmra.mxu0 %v808
    %v876 = vpop.f32.mrf.mxu0
    %v877 = vadd.f32 0.0, %v876
    %v878 = vpop.f32.mrf.mxu0
    %879 = vdwg.mxu0
    %v880 = vadd.f32 %v807, %v877
    %v881 = vxor.u32 %v880, 2147483648
    %v882 = vmul.f32 %v881, 1.442695
    %v883 = vpow.pop %v882
    %v884 = vadd.f32 %v883, 1.0
    %v885 = vrcp.pop %v884
    %v886 = vmul.f32 1.0, %v885
    %v887 = vtanh.pop %v880
    %v888 = vmul.f32 %v886, %v795
    %890 = vrot.lane.b32.xlu0 %v887, 64
    %v891 = vpop.permute.xlu0 %890
    %v893 = vmul.f32 %v886, %v891
    %895 = vrot.lane.b32.xlu0 %v893, 32
    %v896 = vpop.permute.xlu0 %895
    %v898 = vadd.f32 %v888, %v896
    %v899 = vtanh.pop %v898
    %901 = vrot.lane.b32.xlu0 %v899, 64
    %v902 = vpop.permute.xlu0 %901
    %v904 = vmul.f32 %v886, %v902
    %906 = vrot.lane.b32.xlu0 %v904, 32
    %v907 = vpop.permute.xlu0 %906
    %909 = vst.msk [vmem:[#allocation3 + $0x6] sm:$0x1] %vm290, %v907
    %v910 = vld [vmem:[#allocation2 + $0x7] sm:$0x1]
    %v911 = vsel %vm108, %v907, 0
    %913 = vmatprep.subr.mxu0 0.0
    %914 = vmatpush1.msra.mxu0 0.0
    %915 = vmatprep.subr.mxu0 0.0
    %916 = vmatpush1.msra.mxu0 0.0
    %917 = vmatprep.subr.mxu0 0.0
    %918 = vmatpush1.msra.mxu0 0.0
    %919 = vmatprep.subr.mxu0 0.0
    %920 = vmatpush1.msra.mxu0 0.0
    %921 = vmatprep.subr.mxu0 0.0
    %922 = vmatpush1.msra.mxu0 0.0
    %923 = vmatprep.subr.mxu0 0.0
    %924 = vmatpush1.msra.mxu0 0.0
    %925 = vmatprep.subr.mxu0 0.0
    %926 = vmatpush1.msra.mxu0 0.0
    %927 = vmatprep.subr.mxu0 0.0
    %928 = vmatpush1.msra.mxu0 0.0
    %929 = vmatprep.subr.mxu0 0.0
    %930 = vmatpush1.msra.mxu0 0.0
    %931 = vmatprep.subr.mxu0 0.0
    %932 = vmatpush1.msra.mxu0 0.0
    %933 = vmatprep.subr.mxu0 0.0
    %934 = vmatpush1.msra.mxu0 0.0
    %935 = vmatprep.subr.mxu0 0.0
    %936 = vmatpush1.msra.mxu0 0.0
    %937 = vmatprep.subr.mxu0 0.0
    %938 = vmatpush1.msra.mxu0 %v186
    %939 = vmatprep.subr.mxu0 0.0
    %940 = vmatpush1.msra.mxu0 %v185
    %941 = vmatprep.subr.mxu0 0.0
    %942 = vmatpush1.msra.mxu0 %v184
    %943 = vmatprep.subr.mxu0 0.0
    %944 = vmatpush1.msra.mxu0 %v183
    %945 = vmatprep.subr.mxu0 0.0
    %946 = vmatpush2.msra.mxu0 0.0
    %947 = vmatprep.subr.mxu0 0.0
    %948 = vmatpush2.msra.mxu0 0.0
    %949 = vmatprep.subr.mxu0 0.0
    %950 = vmatpush2.msra.mxu0 0.0
    %951 = vmatprep.subr.mxu0 0.0
    %952 = vmatpush2.msra.mxu0 0.0
    %953 = vmatprep.subr.mxu0 0.0
    %954 = vmatpush2.msra.mxu0 0.0
    %955 = vmatprep.subr.mxu0 0.0
    %956 = vmatpush2.msra.mxu0 0.0
    %957 = vmatprep.subr.mxu0 0.0
    %958 = vmatpush2.msra.mxu0 0.0
    %959 = vmatprep.subr.mxu0 0.0
    %960 = vmatpush2.msra.mxu0 0.0
    %961 = vmatprep.subr.mxu0 0.0
    %962 = vmatpush2.msra.mxu0 0.0
    %963 = vmatprep.subr.mxu0 0.0
    %964 = vmatpush2.msra.mxu0 0.0
    %965 = vmatprep.subr.mxu0 0.0
    %966 = vmatpush2.msra.mxu0 0.0
    %967 = vmatprep.subr.mxu0 0.0
    %968 = vmatpush2.msra.mxu0 0.0
    %969 = vmatprep.subr.mxu0 0.0
    %970 = vmatpush2.msra.mxu0 0.0
    %971 = vmatprep.subr.mxu0 0.0
    %972 = vmatpush2.msra.mxu0 0.0
    %973 = vmatprep.subr.mxu0 0.0
    %974 = vmatpush2.msra.mxu0 0.0
    %975 = vmatprep.subr.mxu0 0.0
    %976 = vmatpush2.msra.mxu0 0.0
    %977 = vmatprep.mubr.f32.mxu0 0.0
    %978 = vmatmul.mubr.f32.gmra.mxu0 %v911
    %v979 = vpop.f32.mrf.mxu0
    %v980 = vadd.f32 0.0, %v979
    %v981 = vpop.f32.mrf.mxu0
    %982 = vdwg.mxu0
    %v983 = vadd.f32 %v910, %v980
    %v984 = vxor.u32 %v983, 2147483648
    %v985 = vmul.f32 %v984, 1.442695
    %v986 = vpow.pop %v985
    %v987 = vadd.f32 %v986, 1.0
    %v988 = vrcp.pop %v987
    %v989 = vmul.f32 1.0, %v988
    %v990 = vtanh.pop %v983
    %v991 = vmul.f32 %v989, %v898
    %993 = vrot.lane.b32.xlu0 %v990, 64
    %v994 = vpop.permute.xlu0 %993
    %v996 = vmul.f32 %v989, %v994
    %998 = vrot.lane.b32.xlu0 %v996, 32
    %v999 = vpop.permute.xlu0 %998
    %v1001 = vadd.f32 %v991, %v999
    %v1002 = vtanh.pop %v1001
    %1004 = vrot.lane.b32.xlu0 %v1002, 64
    %v1005 = vpop.permute.xlu0 %1004
    %v1007 = vmul.f32 %v989, %v1005
    %1009 = vrot.lane.b32.xlu0 %v1007, 32
    %v1010 = vpop.permute.xlu0 %1009
    %1012 = vst.msk [vmem:[#allocation3 + $0x7] sm:$0x1] %vm290, %v1010
    %v1013 = vld [vmem:[#allocation3] sm:$0xff]
    %v1014 = vld [vmem:[#allocation10] sm:$0xff]
    %v1015 = vld [vmem:[#allocation10 + $0x8] sm:$0xff]
    %v1016 = vld [vmem:[#allocation10 + $0x10] sm:$0xff]
    %v1017 = vld [vmem:[#allocation10 + $0x18] sm:$0xff]
    %v1018 = vld [vmem:[%s6] sm:$0x1]
    %v1020 = vlaneseq
    %v1021 = vshrl.u32 %v1020, 7
    %v1022 = vsub.s32 0, %v1021
    %v1023 = vrot.slane %v1018, %v1022
    %v1026 = vsel %vm108, %v1013, 0
    %1028 = vmatprep.subr.mxu0 0.0
    %1029 = vmatpush1.msra.mxu0 0.0
    %1030 = vmatprep.subr.mxu0 0.0
    %1031 = vmatpush1.msra.mxu0 0.0
    %1032 = vmatprep.subr.mxu0 0.0
    %1033 = vmatpush1.msra.mxu0 0.0
    %1034 = vmatprep.subr.mxu0 0.0
    %1035 = vmatpush1.msra.mxu0 0.0
    %1036 = vmatprep.subr.mxu0 0.0
    %1037 = vmatpush1.msra.mxu0 0.0
    %1038 = vmatprep.subr.mxu0 0.0
    %1039 = vmatpush1.msra.mxu0 0.0
    %1040 = vmatprep.subr.mxu0 0.0
    %1041 = vmatpush1.msra.mxu0 0.0
    %1042 = vmatprep.subr.mxu0 0.0
    %1043 = vmatpush1.msra.mxu0 0.0
    %1044 = vmatprep.subr.mxu0 0.0
    %1045 = vmatpush1.msra.mxu0 0.0
    %1046 = vmatprep.subr.mxu0 0.0
    %1047 = vmatpush1.msra.mxu0 0.0
    %1048 = vmatprep.subr.mxu0 0.0
    %1049 = vmatpush1.msra.mxu0 0.0
    %1050 = vmatprep.subr.mxu0 0.0
    %1051 = vmatpush1.msra.mxu0 0.0
    %1052 = vmatprep.subr.mxu0 0.0
    %1053 = vmatpush1.msra.mxu0 %v1017
    %1054 = vmatprep.subr.mxu0 0.0
    %1055 = vmatpush1.msra.mxu0 %v1016
    %1056 = vmatprep.subr.mxu0 0.0
    %1057 = vmatpush1.msra.mxu0 %v1015
    %1058 = vmatprep.subr.mxu0 0.0
    %1059 = vmatpush1.msra.mxu0 %v1014
    %1060 = vmatprep.subr.mxu0 0.0
    %1061 = vmatpush2.msra.mxu0 0.0
    %1062 = vmatprep.subr.mxu0 0.0
    %1063 = vmatpush2.msra.mxu0 0.0
    %1064 = vmatprep.subr.mxu0 0.0
    %1065 = vmatpush2.msra.mxu0 0.0
    %1066 = vmatprep.subr.mxu0 0.0
    %1067 = vmatpush2.msra.mxu0 0.0
    %1068 = vmatprep.subr.mxu0 0.0
    %1069 = vmatpush2.msra.mxu0 0.0
    %1070 = vmatprep.subr.mxu0 0.0
    %1071 = vmatpush2.msra.mxu0 0.0
    %1072 = vmatprep.subr.mxu0 0.0
    %1073 = vmatpush2.msra.mxu0 0.0
    %1074 = vmatprep.subr.mxu0 0.0
    %1075 = vmatpush2.msra.mxu0 0.0
    %1076 = vmatprep.subr.mxu0 0.0
    %1077 = vmatpush2.msra.mxu0 0.0
    %1078 = vmatprep.subr.mxu0 0.0
    %1079 = vmatpush2.msra.mxu0 0.0
    %1080 = vmatprep.subr.mxu0 0.0
    %1081 = vmatpush2.msra.mxu0 0.0
    %1082 = vmatprep.subr.mxu0 0.0
    %1083 = vmatpush2.msra.mxu0 0.0
    %1084 = vmatprep.subr.mxu0 0.0
    %1085 = vmatpush2.msra.mxu0 0.0
    %1086 = vmatprep.subr.mxu0 0.0
    %1087 = vmatpush2.msra.mxu0 0.0
    %1088 = vmatprep.subr.mxu0 0.0
    %1089 = vmatpush2.msra.mxu0 0.0
    %1090 = vmatprep.subr.mxu0 0.0
    %1091 = vmatpush2.msra.mxu0 0.0
    %1092 = vmatprep.mubr.f32.mxu0 0.0
    %1093 = vmatmul.mubr.f32.gmra.mxu0 %v1026
    %v1094 = vpop.f32.mrf.mxu0
    %v1095 = vadd.f32 %v1023, %v1094
    %v1096 = vpop.f32.mrf.mxu0
    %1097 = vdwg.mxu0
    %1098 = vst [vmem:[#allocation2] sm:$0xff] %v1095
    %v1099 = vld [vmem:[#allocation12] sm:$0xff]
    %v1100 = vld [vmem:[#allocation12 + $0x8] sm:$0xff]
    %v1101 = vld [vmem:[#allocation12 + $0x10] sm:$0xff]
    %v1102 = vld [vmem:[#allocation12 + $0x18] sm:$0xff]
    %v1103 = vld [vmem:[#allocation2] sm:$0x1]
    %1104 = vmatprep.subr.mxu0 0.0
    %1105 = vmatpush1.msra.mxu0 0.0
    %1106 = vmatprep.subr.mxu0 0.0
    %1107 = vmatpush1.msra.mxu0 0.0
    %1108 = vmatprep.subr.mxu0 0.0
    %1109 = vmatpush1.msra.mxu0 0.0
    %1110 = vmatprep.subr.mxu0 0.0
    %1111 = vmatpush1.msra.mxu0 0.0
    %1112 = vmatprep.subr.mxu0 0.0
    %1113 = vmatpush1.msra.mxu0 0.0
    %1114 = vmatprep.subr.mxu0 0.0
    %1115 = vmatpush1.msra.mxu0 0.0
    %1116 = vmatprep.subr.mxu0 0.0
    %1117 = vmatpush1.msra.mxu0 0.0
    %1118 = vmatprep.subr.mxu0 0.0
    %1119 = vmatpush1.msra.mxu0 0.0
    %1120 = vmatprep.subr.mxu0 0.0
    %1121 = vmatpush1.msra.mxu0 0.0
    %1122 = vmatprep.subr.mxu0 0.0
    %1123 = vmatpush1.msra.mxu0 0.0
    %1124 = vmatprep.subr.mxu0 0.0
    %1125 = vmatpush1.msra.mxu0 0.0
    %1126 = vmatprep.subr.mxu0 0.0
    %1127 = vmatpush1.msra.mxu0 0.0
    %1128 = vmatprep.subr.mxu0 0.0
    %1129 = vmatpush1.msra.mxu0 %v1102
    %1130 = vmatprep.subr.mxu0 0.0
    %1131 = vmatpush1.msra.mxu0 %v1101
    %1132 = vmatprep.subr.mxu0 0.0
    %1133 = vmatpush1.msra.mxu0 %v1100
    %1134 = vmatprep.subr.mxu0 0.0
    %1135 = vmatpush1.msra.mxu0 %v1099
    %1136 = vmatprep.subr.mxu0 0.0
    %1137 = vmatpush2.msra.mxu0 0.0
    %1138 = vmatprep.subr.mxu0 0.0
    %1139 = vmatpush2.msra.mxu0 0.0
    %1140 = vmatprep.subr.mxu0 0.0
    %1141 = vmatpush2.msra.mxu0 0.0
    %1142 = vmatprep.subr.mxu0 0.0
    %1143 = vmatpush2.msra.mxu0 0.0
    %1144 = vmatprep.subr.mxu0 0.0
    %1145 = vmatpush2.msra.mxu0 0.0
    %1146 = vmatprep.subr.mxu0 0.0
    %1147 = vmatpush2.msra.mxu0 0.0
    %1148 = vmatprep.subr.mxu0 0.0
    %1149 = vmatpush2.msra.mxu0 0.0
    %1150 = vmatprep.subr.mxu0 0.0
    %1151 = vmatpush2.msra.mxu0 0.0
    %1152 = vmatprep.subr.mxu0 0.0
    %1153 = vmatpush2.msra.mxu0 0.0
    %1154 = vmatprep.subr.mxu0 0.0
    %1155 = vmatpush2.msra.mxu0 0.0
    %1156 = vmatprep.subr.mxu0 0.0
    %1157 = vmatpush2.msra.mxu0 0.0
    %1158 = vmatprep.subr.mxu0 0.0
    %1159 = vmatpush2.msra.mxu0 0.0
    %1160 = vmatprep.subr.mxu0 0.0
    %1161 = vmatpush2.msra.mxu0 0.0
    %1162 = vmatprep.subr.mxu0 0.0
    %1163 = vmatpush2.msra.mxu0 0.0
    %1164 = vmatprep.subr.mxu0 0.0
    %1165 = vmatpush2.msra.mxu0 0.0
    %1166 = vmatprep.subr.mxu0 0.0
    %1167 = vmatpush2.msra.mxu0 0.0
    %1168 = vmatprep.mubr.f32.mxu0 0.0
    %1169 = vmatmul.mubr.f32.gmra.mxu0 %v189
    %v1170 = vpop.f32.mrf.mxu0
    %v1171 = vadd.f32 0.0, %v1170
    %v1172 = vpop.f32.mrf.mxu0
    %1173 = vdwg.mxu0
    %v1174 = vadd.f32 %v1103, %v1171
    %v1175 = vxor.u32 %v1174, 2147483648
    %v1176 = vmul.f32 %v1175, 1.442695
    %v1177 = vpow.pop %v1176
    %v1178 = vadd.f32 %v1177, 1.0
    %v1179 = vrcp.pop %v1178
    %v1180 = vmul.f32 1.0, %v1179
    %v1181 = vtanh.pop %v1174
    %v1182 = vmul.f32 %v1180, 0.0
    %1184 = vrot.lane.b32.xlu0 %v1181, 64
    %v1185 = vpop.permute.xlu0 %1184
    %v1187 = vmul.f32 %v1180, %v1185
    %1189 = vrot.lane.b32.xlu0 %v1187, 32
    %v1190 = vpop.permute.xlu0 %1189
    %v1192 = vadd.f32 %v1182, %v1190
    %v1193 = vtanh.pop %v1192
    %1195 = vrot.lane.b32.xlu0 %v1193, 64
    %v1196 = vpop.permute.xlu0 %1195
    %v1198 = vmul.f32 %v1180, %v1196
    %v1199 = vld [vmem:[#allocation2 + $0x1] sm:$0x1]
    %1201 = vrot.lane.b32.xlu0 %v1198, 32
    %v1202 = vpop.permute.xlu0 %1201
    %v1203 = vsel %vm108, %v1202, 0
    %1205 = vmatprep.subr.mxu0 0.0
    %1206 = vmatpush1.msra.mxu0 0.0
    %1207 = vmatprep.subr.mxu0 0.0
    %1208 = vmatpush1.msra.mxu0 0.0
    %1209 = vmatprep.subr.mxu0 0.0
    %1210 = vmatpush1.msra.mxu0 0.0
    %1211 = vmatprep.subr.mxu0 0.0
    %1212 = vmatpush1.msra.mxu0 0.0
    %1213 = vmatprep.subr.mxu0 0.0
    %1214 = vmatpush1.msra.mxu0 0.0
    %1215 = vmatprep.subr.mxu0 0.0
    %1216 = vmatpush1.msra.mxu0 0.0
    %1217 = vmatprep.subr.mxu0 0.0
    %1218 = vmatpush1.msra.mxu0 0.0
    %1219 = vmatprep.subr.mxu0 0.0
    %1220 = vmatpush1.msra.mxu0 0.0
    %1221 = vmatprep.subr.mxu0 0.0
    %1222 = vmatpush1.msra.mxu0 0.0
    %1223 = vmatprep.subr.mxu0 0.0
    %1224 = vmatpush1.msra.mxu0 0.0
    %1225 = vmatprep.subr.mxu0 0.0
    %1226 = vmatpush1.msra.mxu0 0.0
    %1227 = vmatprep.subr.mxu0 0.0
    %1228 = vmatpush1.msra.mxu0 0.0
    %1229 = vmatprep.subr.mxu0 0.0
    %1230 = vmatpush1.msra.mxu0 %v1102
    %1231 = vmatprep.subr.mxu0 0.0
    %1232 = vmatpush1.msra.mxu0 %v1101
    %1233 = vmatprep.subr.mxu0 0.0
    %1234 = vmatpush1.msra.mxu0 %v1100
    %1235 = vmatprep.subr.mxu0 0.0
    %1236 = vmatpush1.msra.mxu0 %v1099
    %1237 = vmatprep.subr.mxu0 0.0
    %1238 = vmatpush2.msra.mxu0 0.0
    %1239 = vmatprep.subr.mxu0 0.0
    %1240 = vmatpush2.msra.mxu0 0.0
    %1241 = vmatprep.subr.mxu0 0.0
    %1242 = vmatpush2.msra.mxu0 0.0
    %1243 = vmatprep.subr.mxu0 0.0
    %1244 = vmatpush2.msra.mxu0 0.0
    %1245 = vmatprep.subr.mxu0 0.0
    %1246 = vmatpush2.msra.mxu0 0.0
    %1247 = vmatprep.subr.mxu0 0.0
    %1248 = vmatpush2.msra.mxu0 0.0
    %1249 = vmatprep.subr.mxu0 0.0
    %1250 = vmatpush2.msra.mxu0 0.0
    %1251 = vmatprep.subr.mxu0 0.0
    %1252 = vmatpush2.msra.mxu0 0.0
    %1253 = vmatprep.subr.mxu0 0.0
    %1254 = vmatpush2.msra.mxu0 0.0
    %1255 = vmatprep.subr.mxu0 0.0
    %1256 = vmatpush2.msra.mxu0 0.0
    %1257 = vmatprep.subr.mxu0 0.0
    %1258 = vmatpush2.msra.mxu0 0.0
    %1259 = vmatprep.subr.mxu0 0.0
    %1260 = vmatpush2.msra.mxu0 0.0
    %1261 = vmatprep.subr.mxu0 0.0
    %1262 = vmatpush2.msra.mxu0 0.0
    %1263 = vmatprep.subr.mxu0 0.0
    %1264 = vmatpush2.msra.mxu0 0.0
    %1265 = vmatprep.subr.mxu0 0.0
    %1266 = vmatpush2.msra.mxu0 0.0
    %1267 = vmatprep.subr.mxu0 0.0
    %1268 = vmatpush2.msra.mxu0 0.0
    %1269 = vmatprep.mubr.f32.mxu0 0.0
    %1270 = vmatmul.mubr.f32.gmra.mxu0 %v1203
    %v1271 = vpop.f32.mrf.mxu0
    %v1272 = vadd.f32 0.0, %v1271
    %v1273 = vpop.f32.mrf.mxu0
    %1274 = vdwg.mxu0
    %v1275 = vadd.f32 %v1199, %v1272
    %v1276 = vxor.u32 %v1275, 2147483648
    %v1277 = vmul.f32 %v1276, 1.442695
    %v1278 = vpow.pop %v1277
    %v1279 = vadd.f32 %v1278, 1.0
    %v1280 = vrcp.pop %v1279
    %v1281 = vmul.f32 1.0, %v1280
    %v1282 = vtanh.pop %v1275
    %v1283 = vmul.f32 %v1281, %v1192
    %1285 = vrot.lane.b32.xlu0 %v1282, 64
    %v1286 = vpop.permute.xlu0 %1285
    %v1288 = vmul.f32 %v1281, %v1286
    %1290 = vrot.lane.b32.xlu0 %v1288, 32
    %v1291 = vpop.permute.xlu0 %1290
    %v1293 = vadd.f32 %v1283, %v1291
    %v1294 = vtanh.pop %v1293
    %1296 = vrot.lane.b32.xlu0 %v1294, 64
    %v1297 = vpop.permute.xlu0 %1296
    %v1299 = vmul.f32 %v1281, %v1297
    %v1300 = vld [vmem:[#allocation2 + $0x2] sm:$0x1]
    %1302 = vrot.lane.b32.xlu0 %v1299, 32
    %v1303 = vpop.permute.xlu0 %1302
    %v1304 = vsel %vm108, %v1303, 0
    %1306 = vmatprep.subr.mxu0 0.0
    %1307 = vmatpush1.msra.mxu0 0.0
    %1308 = vmatprep.subr.mxu0 0.0
    %1309 = vmatpush1.msra.mxu0 0.0
    %1310 = vmatprep.subr.mxu0 0.0
    %1311 = vmatpush1.msra.mxu0 0.0
    %1312 = vmatprep.subr.mxu0 0.0
    %1313 = vmatpush1.msra.mxu0 0.0
    %1314 = vmatprep.subr.mxu0 0.0
    %1315 = vmatpush1.msra.mxu0 0.0
    %1316 = vmatprep.subr.mxu0 0.0
    %1317 = vmatpush1.msra.mxu0 0.0
    %1318 = vmatprep.subr.mxu0 0.0
    %1319 = vmatpush1.msra.mxu0 0.0
    %1320 = vmatprep.subr.mxu0 0.0
    %1321 = vmatpush1.msra.mxu0 0.0
    %1322 = vmatprep.subr.mxu0 0.0
    %1323 = vmatpush1.msra.mxu0 0.0
    %1324 = vmatprep.subr.mxu0 0.0
    %1325 = vmatpush1.msra.mxu0 0.0
    %1326 = vmatprep.subr.mxu0 0.0
    %1327 = vmatpush1.msra.mxu0 0.0
    %1328 = vmatprep.subr.mxu0 0.0
    %1329 = vmatpush1.msra.mxu0 0.0
    %1330 = vmatprep.subr.mxu0 0.0
    %1331 = vmatpush1.msra.mxu0 %v1102
    %1332 = vmatprep.subr.mxu0 0.0
    %1333 = vmatpush1.msra.mxu0 %v1101
    %1334 = vmatprep.subr.mxu0 0.0
    %1335 = vmatpush1.msra.mxu0 %v1100
    %1336 = vmatprep.subr.mxu0 0.0
    %1337 = vmatpush1.msra.mxu0 %v1099
    %1338 = vmatprep.subr.mxu0 0.0
    %1339 = vmatpush2.msra.mxu0 0.0
    %1340 = vmatprep.subr.mxu0 0.0
    %1341 = vmatpush2.msra.mxu0 0.0
    %1342 = vmatprep.subr.mxu0 0.0
    %1343 = vmatpush2.msra.mxu0 0.0
    %1344 = vmatprep.subr.mxu0 0.0
    %1345 = vmatpush2.msra.mxu0 0.0
    %1346 = vmatprep.subr.mxu0 0.0
    %1347 = vmatpush2.msra.mxu0 0.0
    %1348 = vmatprep.subr.mxu0 0.0
    %1349 = vmatpush2.msra.mxu0 0.0
    %1350 = vmatprep.subr.mxu0 0.0
    %1351 = vmatpush2.msra.mxu0 0.0
    %1352 = vmatprep.subr.mxu0 0.0
    %1353 = vmatpush2.msra.mxu0 0.0
    %1354 = vmatprep.subr.mxu0 0.0
    %1355 = vmatpush2.msra.mxu0 0.0
    %1356 = vmatprep.subr.mxu0 0.0
    %1357 = vmatpush2.msra.mxu0 0.0
    %1358 = vmatprep.subr.mxu0 0.0
    %1359 = vmatpush2.msra.mxu0 0.0
    %1360 = vmatprep.subr.mxu0 0.0
    %1361 = vmatpush2.msra.mxu0 0.0
    %1362 = vmatprep.subr.mxu0 0.0
    %1363 = vmatpush2.msra.mxu0 0.0
    %1364 = vmatprep.subr.mxu0 0.0
    %1365 = vmatpush2.msra.mxu0 0.0
    %1366 = vmatprep.subr.mxu0 0.0
    %1367 = vmatpush2.msra.mxu0 0.0
    %1368 = vmatprep.subr.mxu0 0.0
    %1369 = vmatpush2.msra.mxu0 0.0
    %1370 = vmatprep.mubr.f32.mxu0 0.0
    %1371 = vmatmul.mubr.f32.gmra.mxu0 %v1304
    %v1372 = vpop.f32.mrf.mxu0
    %v1373 = vadd.f32 0.0, %v1372
    %v1374 = vpop.f32.mrf.mxu0
    %1375 = vdwg.mxu0
    %v1376 = vadd.f32 %v1300, %v1373
    %v1377 = vxor.u32 %v1376, 2147483648
    %v1378 = vmul.f32 %v1377, 1.442695
    %v1379 = vpow.pop %v1378
    %v1380 = vadd.f32 %v1379, 1.0
    %v1381 = vrcp.pop %v1380
    %v1382 = vmul.f32 1.0, %v1381
    %v1383 = vtanh.pop %v1376
    %v1384 = vmul.f32 %v1382, %v1293
    %1386 = vrot.lane.b32.xlu0 %v1383, 64
    %v1387 = vpop.permute.xlu0 %1386
    %v1389 = vmul.f32 %v1382, %v1387
    %1391 = vrot.lane.b32.xlu0 %v1389, 32
    %v1392 = vpop.permute.xlu0 %1391
    %v1394 = vadd.f32 %v1384, %v1392
    %v1395 = vtanh.pop %v1394
    %1397 = vrot.lane.b32.xlu0 %v1395, 64
    %v1398 = vpop.permute.xlu0 %1397
    %v1400 = vmul.f32 %v1382, %v1398
    %v1401 = vld [vmem:[#allocation2 + $0x3] sm:$0x1]
    %1403 = vrot.lane.b32.xlu0 %v1400, 32
    %v1404 = vpop.permute.xlu0 %1403
    %v1405 = vsel %vm108, %v1404, 0
    %1407 = vmatprep.subr.mxu0 0.0
    %1408 = vmatpush1.msra.mxu0 0.0
    %1409 = vmatprep.subr.mxu0 0.0
    %1410 = vmatpush1.msra.mxu0 0.0
    %1411 = vmatprep.subr.mxu0 0.0
    %1412 = vmatpush1.msra.mxu0 0.0
    %1413 = vmatprep.subr.mxu0 0.0
    %1414 = vmatpush1.msra.mxu0 0.0
    %1415 = vmatprep.subr.mxu0 0.0
    %1416 = vmatpush1.msra.mxu0 0.0
    %1417 = vmatprep.subr.mxu0 0.0
    %1418 = vmatpush1.msra.mxu0 0.0
    %1419 = vmatprep.subr.mxu0 0.0
    %1420 = vmatpush1.msra.mxu0 0.0
    %1421 = vmatprep.subr.mxu0 0.0
    %1422 = vmatpush1.msra.mxu0 0.0
    %1423 = vmatprep.subr.mxu0 0.0
    %1424 = vmatpush1.msra.mxu0 0.0
    %1425 = vmatprep.subr.mxu0 0.0
    %1426 = vmatpush1.msra.mxu0 0.0
    %1427 = vmatprep.subr.mxu0 0.0
    %1428 = vmatpush1.msra.mxu0 0.0
    %1429 = vmatprep.subr.mxu0 0.0
    %1430 = vmatpush1.msra.mxu0 0.0
    %1431 = vmatprep.subr.mxu0 0.0
    %1432 = vmatpush1.msra.mxu0 %v1102
    %1433 = vmatprep.subr.mxu0 0.0
    %1434 = vmatpush1.msra.mxu0 %v1101
    %1435 = vmatprep.subr.mxu0 0.0
    %1436 = vmatpush1.msra.mxu0 %v1100
    %1437 = vmatprep.subr.mxu0 0.0
    %1438 = vmatpush1.msra.mxu0 %v1099
    %1439 = vmatprep.subr.mxu0 0.0
    %1440 = vmatpush2.msra.mxu0 0.0
    %1441 = vmatprep.subr.mxu0 0.0
    %1442 = vmatpush2.msra.mxu0 0.0
    %1443 = vmatprep.subr.mxu0 0.0
    %1444 = vmatpush2.msra.mxu0 0.0
    %1445 = vmatprep.subr.mxu0 0.0
    %1446 = vmatpush2.msra.mxu0 0.0
    %1447 = vmatprep.subr.mxu0 0.0
    %1448 = vmatpush2.msra.mxu0 0.0
    %1449 = vmatprep.subr.mxu0 0.0
    %1450 = vmatpush2.msra.mxu0 0.0
    %1451 = vmatprep.subr.mxu0 0.0
    %1452 = vmatpush2.msra.mxu0 0.0
    %1453 = vmatprep.subr.mxu0 0.0
    %1454 = vmatpush2.msra.mxu0 0.0
    %1455 = vmatprep.subr.mxu0 0.0
    %1456 = vmatpush2.msra.mxu0 0.0
    %1457 = vmatprep.subr.mxu0 0.0
    %1458 = vmatpush2.msra.mxu0 0.0
    %1459 = vmatprep.subr.mxu0 0.0
    %1460 = vmatpush2.msra.mxu0 0.0
    %1461 = vmatprep.subr.mxu0 0.0
    %1462 = vmatpush2.msra.mxu0 0.0
    %1463 = vmatprep.subr.mxu0 0.0
    %1464 = vmatpush2.msra.mxu0 0.0
    %1465 = vmatprep.subr.mxu0 0.0
    %1466 = vmatpush2.msra.mxu0 0.0
    %1467 = vmatprep.subr.mxu0 0.0
    %1468 = vmatpush2.msra.mxu0 0.0
    %1469 = vmatprep.subr.mxu0 0.0
    %1470 = vmatpush2.msra.mxu0 0.0
    %1471 = vmatprep.mubr.f32.mxu0 0.0
    %1472 = vmatmul.mubr.f32.gmra.mxu0 %v1405
    %v1473 = vpop.f32.mrf.mxu0
    %v1474 = vadd.f32 0.0, %v1473
    %v1475 = vpop.f32.mrf.mxu0
    %1476 = vdwg.mxu0
    %v1477 = vadd.f32 %v1401, %v1474
    %v1478 = vxor.u32 %v1477, 2147483648
    %v1479 = vmul.f32 %v1478, 1.442695
    %v1480 = vpow.pop %v1479
    %v1481 = vadd.f32 %v1480, 1.0
    %v1482 = vrcp.pop %v1481
    %v1483 = vmul.f32 1.0, %v1482
    %v1484 = vtanh.pop %v1477
    %v1485 = vmul.f32 %v1483, %v1394
    %1487 = vrot.lane.b32.xlu0 %v1484, 64
    %v1488 = vpop.permute.xlu0 %1487
    %v1490 = vmul.f32 %v1483, %v1488
    %1492 = vrot.lane.b32.xlu0 %v1490, 32
    %v1493 = vpop.permute.xlu0 %1492
    %v1495 = vadd.f32 %v1485, %v1493
    %v1496 = vtanh.pop %v1495
    %1498 = vrot.lane.b32.xlu0 %v1496, 64
    %v1499 = vpop.permute.xlu0 %1498
    %v1501 = vmul.f32 %v1483, %v1499
    %v1502 = vld [vmem:[#allocation2 + $0x4] sm:$0x1]
    %1504 = vrot.lane.b32.xlu0 %v1501, 32
    %v1505 = vpop.permute.xlu0 %1504
    %v1506 = vsel %vm108, %v1505, 0
    %1508 = vmatprep.subr.mxu0 0.0
    %1509 = vmatpush1.msra.mxu0 0.0
    %1510 = vmatprep.subr.mxu0 0.0
    %1511 = vmatpush1.msra.mxu0 0.0
    %1512 = vmatprep.subr.mxu0 0.0
    %1513 = vmatpush1.msra.mxu0 0.0
    %1514 = vmatprep.subr.mxu0 0.0
    %1515 = vmatpush1.msra.mxu0 0.0
    %1516 = vmatprep.subr.mxu0 0.0
    %1517 = vmatpush1.msra.mxu0 0.0
    %1518 = vmatprep.subr.mxu0 0.0
    %1519 = vmatpush1.msra.mxu0 0.0
    %1520 = vmatprep.subr.mxu0 0.0
    %1521 = vmatpush1.msra.mxu0 0.0
    %1522 = vmatprep.subr.mxu0 0.0
    %1523 = vmatpush1.msra.mxu0 0.0
    %1524 = vmatprep.subr.mxu0 0.0
    %1525 = vmatpush1.msra.mxu0 0.0
    %1526 = vmatprep.subr.mxu0 0.0
    %1527 = vmatpush1.msra.mxu0 0.0
    %1528 = vmatprep.subr.mxu0 0.0
    %1529 = vmatpush1.msra.mxu0 0.0
    %1530 = vmatprep.subr.mxu0 0.0
    %1531 = vmatpush1.msra.mxu0 0.0
    %1532 = vmatprep.subr.mxu0 0.0
    %1533 = vmatpush1.msra.mxu0 %v1102
    %1534 = vmatprep.subr.mxu0 0.0
    %1535 = vmatpush1.msra.mxu0 %v1101
    %1536 = vmatprep.subr.mxu0 0.0
    %1537 = vmatpush1.msra.mxu0 %v1100
    %1538 = vmatprep.subr.mxu0 0.0
    %1539 = vmatpush1.msra.mxu0 %v1099
    %1540 = vmatprep.subr.mxu0 0.0
    %1541 = vmatpush2.msra.mxu0 0.0
    %1542 = vmatprep.subr.mxu0 0.0
    %1543 = vmatpush2.msra.mxu0 0.0
    %1544 = vmatprep.subr.mxu0 0.0
    %1545 = vmatpush2.msra.mxu0 0.0
    %1546 = vmatprep.subr.mxu0 0.0
    %1547 = vmatpush2.msra.mxu0 0.0
    %1548 = vmatprep.subr.mxu0 0.0
    %1549 = vmatpush2.msra.mxu0 0.0
    %1550 = vmatprep.subr.mxu0 0.0
    %1551 = vmatpush2.msra.mxu0 0.0
    %1552 = vmatprep.subr.mxu0 0.0
    %1553 = vmatpush2.msra.mxu0 0.0
    %1554 = vmatprep.subr.mxu0 0.0
    %1555 = vmatpush2.msra.mxu0 0.0
    %1556 = vmatprep.subr.mxu0 0.0
    %1557 = vmatpush2.msra.mxu0 0.0
    %1558 = vmatprep.subr.mxu0 0.0
    %1559 = vmatpush2.msra.mxu0 0.0
    %1560 = vmatprep.subr.mxu0 0.0
    %1561 = vmatpush2.msra.mxu0 0.0
    %1562 = vmatprep.subr.mxu0 0.0
    %1563 = vmatpush2.msra.mxu0 0.0
    %1564 = vmatprep.subr.mxu0 0.0
    %1565 = vmatpush2.msra.mxu0 0.0
    %1566 = vmatprep.subr.mxu0 0.0
    %1567 = vmatpush2.msra.mxu0 0.0
    %1568 = vmatprep.subr.mxu0 0.0
    %1569 = vmatpush2.msra.mxu0 0.0
    %1570 = vmatprep.subr.mxu0 0.0
    %1571 = vmatpush2.msra.mxu0 0.0
    %1572 = vmatprep.mubr.f32.mxu0 0.0
    %1573 = vmatmul.mubr.f32.gmra.mxu0 %v1506
    %v1574 = vpop.f32.mrf.mxu0
    %v1575 = vadd.f32 0.0, %v1574
    %v1576 = vpop.f32.mrf.mxu0
    %1577 = vdwg.mxu0
    %v1578 = vadd.f32 %v1502, %v1575
    %v1579 = vxor.u32 %v1578, 2147483648
    %v1580 = vmul.f32 %v1579, 1.442695
    %v1581 = vpow.pop %v1580
    %v1582 = vadd.f32 %v1581, 1.0
    %v1583 = vrcp.pop %v1582
    %v1584 = vmul.f32 1.0, %v1583
    %v1585 = vtanh.pop %v1578
    %v1586 = vmul.f32 %v1584, %v1495
    %1588 = vrot.lane.b32.xlu0 %v1585, 64
    %v1589 = vpop.permute.xlu0 %1588
    %v1591 = vmul.f32 %v1584, %v1589
    %1593 = vrot.lane.b32.xlu0 %v1591, 32
    %v1594 = vpop.permute.xlu0 %1593
    %v1596 = vadd.f32 %v1586, %v1594
    %v1597 = vtanh.pop %v1596
    %1599 = vrot.lane.b32.xlu0 %v1597, 64
    %v1600 = vpop.permute.xlu0 %1599
    %v1602 = vmul.f32 %v1584, %v1600
    %v1603 = vld [vmem:[#allocation2 + $0x5] sm:$0x1]
    %1605 = vrot.lane.b32.xlu0 %v1602, 32
    %v1606 = vpop.permute.xlu0 %1605
    %v1607 = vsel %vm108, %v1606, 0
    %1609 = vmatprep.subr.mxu0 0.0
    %1610 = vmatpush1.msra.mxu0 0.0
    %1611 = vmatprep.subr.mxu0 0.0
    %1612 = vmatpush1.msra.mxu0 0.0
    %1613 = vmatprep.subr.mxu0 0.0
    %1614 = vmatpush1.msra.mxu0 0.0
    %1615 = vmatprep.subr.mxu0 0.0
    %1616 = vmatpush1.msra.mxu0 0.0
    %1617 = vmatprep.subr.mxu0 0.0
    %1618 = vmatpush1.msra.mxu0 0.0
    %1619 = vmatprep.subr.mxu0 0.0
    %1620 = vmatpush1.msra.mxu0 0.0
    %1621 = vmatprep.subr.mxu0 0.0
    %1622 = vmatpush1.msra.mxu0 0.0
    %1623 = vmatprep.subr.mxu0 0.0
    %1624 = vmatpush1.msra.mxu0 0.0
    %1625 = vmatprep.subr.mxu0 0.0
    %1626 = vmatpush1.msra.mxu0 0.0
    %1627 = vmatprep.subr.mxu0 0.0
    %1628 = vmatpush1.msra.mxu0 0.0
    %1629 = vmatprep.subr.mxu0 0.0
    %1630 = vmatpush1.msra.mxu0 0.0
    %1631 = vmatprep.subr.mxu0 0.0
    %1632 = vmatpush1.msra.mxu0 0.0
    %1633 = vmatprep.subr.mxu0 0.0
    %1634 = vmatpush1.msra.mxu0 %v1102
    %1635 = vmatprep.subr.mxu0 0.0
    %1636 = vmatpush1.msra.mxu0 %v1101
    %1637 = vmatprep.subr.mxu0 0.0
    %1638 = vmatpush1.msra.mxu0 %v1100
    %1639 = vmatprep.subr.mxu0 0.0
    %1640 = vmatpush1.msra.mxu0 %v1099
    %1641 = vmatprep.subr.mxu0 0.0
    %1642 = vmatpush2.msra.mxu0 0.0
    %1643 = vmatprep.subr.mxu0 0.0
    %1644 = vmatpush2.msra.mxu0 0.0
    %1645 = vmatprep.subr.mxu0 0.0
    %1646 = vmatpush2.msra.mxu0 0.0
    %1647 = vmatprep.subr.mxu0 0.0
    %1648 = vmatpush2.msra.mxu0 0.0
    %1649 = vmatprep.subr.mxu0 0.0
    %1650 = vmatpush2.msra.mxu0 0.0
    %1651 = vmatprep.subr.mxu0 0.0
    %1652 = vmatpush2.msra.mxu0 0.0
    %1653 = vmatprep.subr.mxu0 0.0
    %1654 = vmatpush2.msra.mxu0 0.0
    %1655 = vmatprep.subr.mxu0 0.0
    %1656 = vmatpush2.msra.mxu0 0.0
    %1657 = vmatprep.subr.mxu0 0.0
    %1658 = vmatpush2.msra.mxu0 0.0
    %1659 = vmatprep.subr.mxu0 0.0
    %1660 = vmatpush2.msra.mxu0 0.0
    %1661 = vmatprep.subr.mxu0 0.0
    %1662 = vmatpush2.msra.mxu0 0.0
    %1663 = vmatprep.subr.mxu0 0.0
    %1664 = vmatpush2.msra.mxu0 0.0
    %1665 = vmatprep.subr.mxu0 0.0
    %1666 = vmatpush2.msra.mxu0 0.0
    %1667 = vmatprep.subr.mxu0 0.0
    %1668 = vmatpush2.msra.mxu0 0.0
    %1669 = vmatprep.subr.mxu0 0.0
    %1670 = vmatpush2.msra.mxu0 0.0
    %1671 = vmatprep.subr.mxu0 0.0
    %1672 = vmatpush2.msra.mxu0 0.0
    %1673 = vmatprep.mubr.f32.mxu0 0.0
    %1674 = vmatmul.mubr.f32.gmra.mxu0 %v1607
    %v1675 = vpop.f32.mrf.mxu0
    %v1676 = vadd.f32 0.0, %v1675
    %v1677 = vpop.f32.mrf.mxu0
    %1678 = vdwg.mxu0
    %v1679 = vadd.f32 %v1603, %v1676
    %v1680 = vxor.u32 %v1679, 2147483648
    %v1681 = vmul.f32 %v1680, 1.442695
    %v1682 = vpow.pop %v1681
    %v1683 = vadd.f32 %v1682, 1.0
    %v1684 = vrcp.pop %v1683
    %v1685 = vmul.f32 1.0, %v1684
    %v1686 = vtanh.pop %v1679
    %v1687 = vmul.f32 %v1685, %v1596
    %1689 = vrot.lane.b32.xlu0 %v1686, 64
    %v1690 = vpop.permute.xlu0 %1689
    %v1692 = vmul.f32 %v1685, %v1690
    %1694 = vrot.lane.b32.xlu0 %v1692, 32
    %v1695 = vpop.permute.xlu0 %1694
    %v1697 = vadd.f32 %v1687, %v1695
    %v1698 = vtanh.pop %v1697
    %1700 = vrot.lane.b32.xlu0 %v1698, 64
    %v1701 = vpop.permute.xlu0 %1700
    %v1703 = vmul.f32 %v1685, %v1701
    %v1704 = vld [vmem:[#allocation2 + $0x6] sm:$0x1]
    %1706 = vrot.lane.b32.xlu0 %v1703, 32
    %v1707 = vpop.permute.xlu0 %1706
    %v1708 = vsel %vm108, %v1707, 0
    %1710 = vmatprep.subr.mxu0 0.0
    %1711 = vmatpush1.msra.mxu0 0.0
    %1712 = vmatprep.subr.mxu0 0.0
    %1713 = vmatpush1.msra.mxu0 0.0
    %1714 = vmatprep.subr.mxu0 0.0
    %1715 = vmatpush1.msra.mxu0 0.0
    %1716 = vmatprep.subr.mxu0 0.0
    %1717 = vmatpush1.msra.mxu0 0.0
    %1718 = vmatprep.subr.mxu0 0.0
    %1719 = vmatpush1.msra.mxu0 0.0
    %1720 = vmatprep.subr.mxu0 0.0
    %1721 = vmatpush1.msra.mxu0 0.0
    %1722 = vmatprep.subr.mxu0 0.0
    %1723 = vmatpush1.msra.mxu0 0.0
    %1724 = vmatprep.subr.mxu0 0.0
    %1725 = vmatpush1.msra.mxu0 0.0
    %1726 = vmatprep.subr.mxu0 0.0
    %1727 = vmatpush1.msra.mxu0 0.0
    %1728 = vmatprep.subr.mxu0 0.0
    %1729 = vmatpush1.msra.mxu0 0.0
    %1730 = vmatprep.subr.mxu0 0.0
    %1731 = vmatpush1.msra.mxu0 0.0
    %1732 = vmatprep.subr.mxu0 0.0
    %1733 = vmatpush1.msra.mxu0 0.0
    %1734 = vmatprep.subr.mxu0 0.0
    %1735 = vmatpush1.msra.mxu0 %v1102
    %1736 = vmatprep.subr.mxu0 0.0
    %1737 = vmatpush1.msra.mxu0 %v1101
    %1738 = vmatprep.subr.mxu0 0.0
    %1739 = vmatpush1.msra.mxu0 %v1100
    %1740 = vmatprep.subr.mxu0 0.0
    %1741 = vmatpush1.msra.mxu0 %v1099
    %1742 = vmatprep.subr.mxu0 0.0
    %1743 = vmatpush2.msra.mxu0 0.0
    %1744 = vmatprep.subr.mxu0 0.0
    %1745 = vmatpush2.msra.mxu0 0.0
    %1746 = vmatprep.subr.mxu0 0.0
    %1747 = vmatpush2.msra.mxu0 0.0
    %1748 = vmatprep.subr.mxu0 0.0
    %1749 = vmatpush2.msra.mxu0 0.0
    %1750 = vmatprep.subr.mxu0 0.0
    %1751 = vmatpush2.msra.mxu0 0.0
    %1752 = vmatprep.subr.mxu0 0.0
    %1753 = vmatpush2.msra.mxu0 0.0
    %1754 = vmatprep.subr.mxu0 0.0
    %1755 = vmatpush2.msra.mxu0 0.0
    %1756 = vmatprep.subr.mxu0 0.0
    %1757 = vmatpush2.msra.mxu0 0.0
    %1758 = vmatprep.subr.mxu0 0.0
    %1759 = vmatpush2.msra.mxu0 0.0
    %1760 = vmatprep.subr.mxu0 0.0
    %1761 = vmatpush2.msra.mxu0 0.0
    %1762 = vmatprep.subr.mxu0 0.0
    %1763 = vmatpush2.msra.mxu0 0.0
    %1764 = vmatprep.subr.mxu0 0.0
    %1765 = vmatpush2.msra.mxu0 0.0
    %1766 = vmatprep.subr.mxu0 0.0
    %1767 = vmatpush2.msra.mxu0 0.0
    %1768 = vmatprep.subr.mxu0 0.0
    %1769 = vmatpush2.msra.mxu0 0.0
    %1770 = vmatprep.subr.mxu0 0.0
    %1771 = vmatpush2.msra.mxu0 0.0
    %1772 = vmatprep.subr.mxu0 0.0
    %1773 = vmatpush2.msra.mxu0 0.0
    %1774 = vmatprep.mubr.f32.mxu0 0.0
    %1775 = vmatmul.mubr.f32.gmra.mxu0 %v1708
    %v1776 = vpop.f32.mrf.mxu0
    %v1777 = vadd.f32 0.0, %v1776
    %v1778 = vpop.f32.mrf.mxu0
    %1779 = vdwg.mxu0
    %v1780 = vadd.f32 %v1704, %v1777
    %v1781 = vxor.u32 %v1780, 2147483648
    %v1782 = vmul.f32 %v1781, 1.442695
    %v1783 = vpow.pop %v1782
    %v1784 = vadd.f32 %v1783, 1.0
    %v1785 = vrcp.pop %v1784
    %v1786 = vmul.f32 1.0, %v1785
    %v1787 = vtanh.pop %v1780
    %v1788 = vmul.f32 %v1786, %v1697
    %1790 = vrot.lane.b32.xlu0 %v1787, 64
    %v1791 = vpop.permute.xlu0 %1790
    %v1793 = vmul.f32 %v1786, %v1791
    %1795 = vrot.lane.b32.xlu0 %v1793, 32
    %v1796 = vpop.permute.xlu0 %1795
    %v1798 = vadd.f32 %v1788, %v1796
    %v1799 = vtanh.pop %v1798
    %1801 = vrot.lane.b32.xlu0 %v1799, 64
    %v1802 = vpop.permute.xlu0 %1801
    %v1804 = vmul.f32 %v1786, %v1802
    %v1805 = vld [vmem:[#allocation2 + $0x7] sm:$0x1]
    %1807 = vrot.lane.b32.xlu0 %v1804, 32
    %v1808 = vpop.permute.xlu0 %1807
    %v1809 = vsel %vm108, %v1808, 0
    %1811 = vmatprep.subr.mxu0 0.0
    %1812 = vmatpush1.msra.mxu0 0.0
    %1813 = vmatprep.subr.mxu0 0.0
    %1814 = vmatpush1.msra.mxu0 0.0
    %1815 = vmatprep.subr.mxu0 0.0
    %1816 = vmatpush1.msra.mxu0 0.0
    %1817 = vmatprep.subr.mxu0 0.0
    %1818 = vmatpush1.msra.mxu0 0.0
    %1819 = vmatprep.subr.mxu0 0.0
    %1820 = vmatpush1.msra.mxu0 0.0
    %1821 = vmatprep.subr.mxu0 0.0
    %1822 = vmatpush1.msra.mxu0 0.0
    %1823 = vmatprep.subr.mxu0 0.0
    %1824 = vmatpush1.msra.mxu0 0.0
    %1825 = vmatprep.subr.mxu0 0.0
    %1826 = vmatpush1.msra.mxu0 0.0
    %1827 = vmatprep.subr.mxu0 0.0
    %1828 = vmatpush1.msra.mxu0 0.0
    %1829 = vmatprep.subr.mxu0 0.0
    %1830 = vmatpush1.msra.mxu0 0.0
    %1831 = vmatprep.subr.mxu0 0.0
    %1832 = vmatpush1.msra.mxu0 0.0
    %1833 = vmatprep.subr.mxu0 0.0
    %1834 = vmatpush1.msra.mxu0 0.0
    %1835 = vmatprep.subr.mxu0 0.0
    %1836 = vmatpush1.msra.mxu0 %v1102
    %1837 = vmatprep.subr.mxu0 0.0
    %1838 = vmatpush1.msra.mxu0 %v1101
    %1839 = vmatprep.subr.mxu0 0.0
    %1840 = vmatpush1.msra.mxu0 %v1100
    %1841 = vmatprep.subr.mxu0 0.0
    %1842 = vmatpush1.msra.mxu0 %v1099
    %1843 = vmatprep.subr.mxu0 0.0
    %1844 = vmatpush2.msra.mxu0 0.0
    %1845 = vmatprep.subr.mxu0 0.0
    %1846 = vmatpush2.msra.mxu0 0.0
    %1847 = vmatprep.subr.mxu0 0.0
    %1848 = vmatpush2.msra.mxu0 0.0
    %1849 = vmatprep.subr.mxu0 0.0
    %1850 = vmatpush2.msra.mxu0 0.0
    %1851 = vmatprep.subr.mxu0 0.0
    %1852 = vmatpush2.msra.mxu0 0.0
    %1853 = vmatprep.subr.mxu0 0.0
    %1854 = vmatpush2.msra.mxu0 0.0
    %1855 = vmatprep.subr.mxu0 0.0
    %1856 = vmatpush2.msra.mxu0 0.0
    %1857 = vmatprep.subr.mxu0 0.0
    %1858 = vmatpush2.msra.mxu0 0.0
    %1859 = vmatprep.subr.mxu0 0.0
    %1860 = vmatpush2.msra.mxu0 0.0
    %1861 = vmatprep.subr.mxu0 0.0
    %1862 = vmatpush2.msra.mxu0 0.0
    %1863 = vmatprep.subr.mxu0 0.0
    %1864 = vmatpush2.msra.mxu0 0.0
    %1865 = vmatprep.subr.mxu0 0.0
    %1866 = vmatpush2.msra.mxu0 0.0
    %1867 = vmatprep.subr.mxu0 0.0
    %1868 = vmatpush2.msra.mxu0 0.0
    %1869 = vmatprep.subr.mxu0 0.0
    %1870 = vmatpush2.msra.mxu0 0.0
    %1871 = vmatprep.subr.mxu0 0.0
    %1872 = vmatpush2.msra.mxu0 0.0
    %1873 = vmatprep.subr.mxu0 0.0
    %1874 = vmatpush2.msra.mxu0 0.0
    %1875 = vmatprep.mubr.f32.mxu0 0.0
    %1876 = vmatmul.mubr.f32.gmra.mxu0 %v1809
    %v1877 = vpop.f32.mrf.mxu0
    %v1878 = vadd.f32 0.0, %v1877
    %v1879 = vpop.f32.mrf.mxu0
    %1880 = vdwg.mxu0
    %v1881 = vadd.f32 %v1805, %v1878
    %v1882 = vxor.u32 %v1881, 2147483648
    %v1883 = vmul.f32 %v1882, 1.442695
    %v1884 = vpow.pop %v1883
    %v1885 = vadd.f32 %v1884, 1.0
    %v1886 = vrcp.pop %v1885
    %v1887 = vmul.f32 1.0, %v1886
    %v1888 = vtanh.pop %v1881
    %v1889 = vmul.f32 %v1887, %v1798
    %1891 = vrot.lane.b32.xlu0 %v1888, 64
    %v1892 = vpop.permute.xlu0 %1891
    %v1894 = vmul.f32 %v1887, %v1892
    %1896 = vrot.lane.b32.xlu0 %v1894, 32
    %v1897 = vpop.permute.xlu0 %1896
    %v1899 = vadd.f32 %v1889, %v1897
    %v1900 = vtanh.pop %v1899
    %1902 = vrot.lane.b32.xlu0 %v1900, 64
    %v1903 = vpop.permute.xlu0 %1902
    %v1905 = vmul.f32 %v1887, %v1903
    %1906 = vst.msk [vmem:[#allocation13] sm:$0x1] %vm290, %v1010
    %1908 = vrot.lane.b32.xlu0 %v1905, 32
    %v1909 = vpop.permute.xlu0 %1908
    %1911 = vst.msk [vmem:[#allocation13 + $0x1] sm:$0x1] %vm290, %v1909
    %1913 = vrot.lane.b32.xlu0 %v1001, 96
    %v1914 = vpop.permute.xlu0 %1913
    %1916 = vst.msk [vmem:[#allocation14] sm:$0x1] %vm290, %v1914
    %1918 = vrot.lane.b32.xlu0 %v1899, 96
    %v1919 = vpop.permute.xlu0 %1918
    %1921 = vst.msk [vmem:[#allocation14 + $0x1] sm:$0x1] %vm290, %v1919
    // Predicated region
    $region50: #{tpu_custom_call.1} parent=1 // pred_check
      _
    $region51: #{tpu_custom_call.1} parent=1 // pred_check_branch
      %1923 = sbr.rel (0) target = $region53
    $region52: #{tpu_custom_call.1} parent=1 // pred_region
      %s1925 = ssub.s32 32, 32
      %1926 = vsyncadd [#allocation6], %s1925
      %s1928 = sshll.u32 [#allocation13], 4
      %s1929 = int_to_ptr.vmem [resolvable:$true] %s1928
      %1931 = dma.vmem_to_hbm [thread:$0]  %s1929, 32, %s7, [#allocation6]
    $region53: #{tpu_custom_call.1} parent=1 // pred_fallthru
      _
    // Predicated region
    $region54: #{tpu_custom_call.1} parent=1 // pred_check
      _
    $region55: #{tpu_custom_call.1} parent=1 // pred_check_branch
      %1933 = sbr.rel (0) target = $region57
    $region56: #{tpu_custom_call.1} parent=1 // pred_region
      %s1935 = ssub.s32 32, 32
      %1936 = vsyncadd [#allocation15], %s1935
      %s1938 = sshll.u32 [#allocation14], 4
      %s1939 = int_to_ptr.vmem [resolvable:$true] %s1938
      %1941 = dma.vmem_to_hbm [thread:$0]  %s1939, 32, %s8, [#allocation15]
    $region57: #{tpu_custom_call.1} parent=1 // pred_fallthru
      _
    // Predicated region
    $region58: #{tpu_custom_call.1} parent=1 // pred_check
      _
    $region59: #{tpu_custom_call.1} parent=1 // pred_check_branch
      %1943 = sbr.rel (0) target = $region61
    $region60: #{tpu_custom_call.1} parent=1 // pred_region
      %1944 = dma.done [#allocation6], 32
    $region61: #{tpu_custom_call.1} parent=1 // pred_fallthru
      _
    // Predicated region
    $region62: #{tpu_custom_call.1} parent=1 // pred_check
      _
    $region63: #{tpu_custom_call.1} parent=1 // pred_check_branch
      %1946 = sbr.rel (0) target = $region65
    $region64: #{tpu_custom_call.1} parent=1 // pred_region
      %1947 = dma.done [#allocation15], 32
    $region65: #{tpu_custom_call.1} parent=1 // pred_fallthru
      _
    %1948 = vsyncpa [#allocation5], 1
    %1949 = vsyncpa [#allocation8], 1
    %1950 = vsyncpa [#allocation11], 1
    %1951 = vsyncpa [#allocation6], 1
    %1952 = vsyncpa [#allocation15], 1

</llo_original>
